<compile_context>
chip_gen: v7x
topology: tpu7x:2x2x1
jax: 0.10.0
libtpu: 0.0.40
codegen_flags: <defaults>
</compile_context>

<pallas_src>
import numpy as np
import jax
import jax.numpy as jnp
from jax.experimental import pallas as pl
from jax.experimental.pallas import tpu as pltpu

# Hyper-parameters fixed by GeometricTerm.__init__ (defaults of BoxTerm / PositionTerm)
INPUT_DIM = 512          # sinusoid embedding dimension per coordinate
OUTPUT_DIM = 256         # rows of W_box_k / W_im
OUTPUT_SIZE = 7
K = OUTPUT_SIZE ** 2     # 49 W_box matrices

_HIGHEST = jax.lax.Precision.HIGHEST


# --------------------------------------------------------------------------- #
# Sinusoidal embedding (pure-JAX glue, mirrors `embedding(z, c)`)
# --------------------------------------------------------------------------- #
def sinusoid_embedding(z, c):
    """cat(sin(z / 1000**(i/c)) for odd i, cos(z / 1000**(j/c)) for even j)."""
    z = jnp.asarray(z, jnp.float32)
    odd = np.arange(1, c, 2, dtype=np.float64)
    even = np.arange(0, c, 2, dtype=np.float64)
    sin_div = jnp.asarray(1000.0 ** (odd / c), jnp.float32)
    cos_div = jnp.asarray(1000.0 ** (even / c), jnp.float32)
    z = z[..., None]
    return jnp.concatenate([jnp.sin(z / sin_div), jnp.cos(z / cos_div)], axis=-1)


def _round_up(x, m):
    return (x + m - 1) // m * m


def _pick_tx(H, W, max_lanes=1024):
    """Row-tile TX for the geom kernel: TX | H and TX*W a multiple of 128."""
    cands = [t for t in range(1, H + 1) if H % t == 0 and (t * W) % 128 == 0]
    if not cands:
        # TODO(synk): W with no factor making TX*W a multiple of 128 falls back to a
        # single full-H block -> masked (partial-lane) stores; pad W upstream for speed.
        return H
    small = [t for t in cands if t * W <= max_lanes]
    return max(small) if small else min(cands)


def _pick_tm(nbk_pad, cap=1024):
    """Row tile for the geom output: divisor of NBK_pad, multiple of 8, <= cap."""
    cands = [t for t in range(8, min(nbk_pad, cap) + 1, 8) if nbk_pad % t == 0]
    return max(cands) if cands else nbk_pad


def prepare_geometric_params(params):
    """One-time parameter prep (call at init, NOT per forward call)."""
    out = dict(params)
    out["W_box_flatT_bf16"] = (
        jnp.asarray(params["W_box"], jnp.float32)
        .reshape(K * OUTPUT_DIM, INPUT_DIM).T.astype(jnp.bfloat16))      # (512, 12544)
    return out


# --------------------------------------------------------------------------- #
# Pallas kernels
# --------------------------------------------------------------------------- #
def _box_kernel(b_ref, wT_ref, u_ref):
    # b (NB_pad, 512) bf16 @ W_box_flat^T tile (512, TN) bf16 -> f32 acc -> bf16 store
    u_ref[...] = jnp.dot(b_ref[...], wT_ref[...],
                         preferred_element_type=jnp.float32).astype(u_ref.dtype)


def _geom_kernel(ga_ref, gb_ref, ea_ref, eb_ref, g_ref):
    # Lane-dense g tile: g[n, xl*W + y] = GA[n, x0+xl] + GB[n, y], realised as
    # two tiny one-hot "expansion" matmuls on the MXU (f32 accumulation).
    # E_A / E_B are exact 0/1 in bf16, so this is just a dense, relayout-free
    # broadcast-add; the VPU does no work and no reshape copy is materialised.
    acc = jnp.dot(ga_ref[...], ea_ref[...], preferred_element_type=jnp.float32)
    acc = acc + jnp.dot(gb_ref[...], eb_ref[...], preferred_element_type=jnp.float32)
    g_ref[...] = acc


# --------------------------------------------------------------------------- #
# GeometricTerm forward
# --------------------------------------------------------------------------- #
def geometric_term_pallas(x, rois, params):
    """Returns a list of (image_index, array(49, H, W)) like GeometricTerm.forward."""
    N, _, H, W = x.shape                       # only the shape of `input` is used
    V_box, W_im = params["V_box"], params["W_im"]
    rois_np = np.asarray(rois, np.float64)     # host copy for the matching loop
    rois = jnp.asarray(rois, jnp.float32)
    NB = rois.shape[0]
    if NB == 0:                                # empty-ROI guard
        return []
    box_idx = rois_np[:, 0].astype(np.int64)

    # Pre-transposed bf16 weight (one-time init); fallback only for convenience.
    wflatT = params.get("W_box_flatT_bf16")
    if wflatT is None:
        wflatT = (jnp.asarray(params["W_box"], jnp.float32)
                  .reshape(K * OUTPUT_DIM, INPUT_DIM).T.astype(jnp.bfloat16))

    # ---- box term (BoxTerm.forward) ---------------------------------------- #
    # eps per roi: cat(emb(x1), emb(y1), emb(x2), emb(y2)) -> (NB, 2048)
    eps = sinusoid_embedding(rois[:, 1:5], INPUT_DIM).reshape(NB, 4 * INPUT_DIM)
    b = jnp.dot(eps, V_box.T, precision=_HIGHEST)             # (NB, 512) f32
    NB_pad = _round_up(max(NB, 16), 16)                       # bf16-packed M dim
    b_pad = jnp.pad(b, ((0, NB_pad - NB), (0, 0))).astype(jnp.bfloat16)

    KN = K * OUTPUT_DIM                       # 12544
    TN = 1792                                 # 14*128 lanes -> 7 parallel grid steps
    u_pad = pl.pallas_call(
        _box_kernel,
        out_shape=jax.ShapeDtypeStruct((NB_pad, KN), jnp.bfloat16),
        grid=(KN // TN,),
        in_specs=[
            pl.BlockSpec((NB_pad, INPUT_DIM), lambda j: (0, 0)),   # b resident
            pl.BlockSpec((INPUT_DIM, TN), lambda j: (0, j)),       # weight stream
        ],
        out_specs=pl.BlockSpec((NB_pad, TN), lambda j: (0, j)),
        compiler_params=pltpu.CompilerParams(
            dimension_semantics=("parallel",),
            vmem_limit_bytes=32 * 1024 * 1024),
    )(b_pad, wflatT)                                          # (NB_pad, 12544) bf16

    NBK = NB * K
    NBK_pad = NB_pad * K                      # multiple of 16 (padded boxes at end)
    u_mat = u_pad.reshape(NBK_pad, OUTPUT_DIM)                # free reshape, bf16

    # ---- position term (PositionTerm.forward), fully separable -------------- #
    embH = sinusoid_embedding(jnp.arange(H), INPUT_DIM)       # (H, 512)
    embW = sinusoid_embedding(jnp.arange(W), INPUT_DIM)       # (W, 512)
    A = jnp.dot(embH, W_im[:, :INPUT_DIM].T, precision=_HIGHEST).astype(jnp.bfloat16)   # (H, 256)
    Bm = jnp.dot(embW, W_im[:, INPUT_DIM:].T, precision=_HIGHEST).astype(jnp.bfloat16)  # (W, 256)
    GA = jnp.dot(u_mat, A.T, preferred_element_type=jnp.bfloat16)    # (NBK_pad, H)
    GB = jnp.dot(u_mat, Bm.T, preferred_element_type=jnp.bfloat16)   # (NBK_pad, W)

    # One-hot expansion matrices (tiny, exact in bf16): E_A[x, x*W+y]=1, E_B[y, x*W+y]=1.
    j = jnp.arange(H * W)
    E_A = (jnp.arange(H)[:, None] == (j // W)[None, :]).astype(jnp.bfloat16)   # (H, HW)
    E_B = (jnp.arange(W)[:, None] == (j % W)[None, :]).astype(jnp.bfloat16)    # (W, HW)

    TX = _pick_tx(H, W)
    TM = _pick_tm(NBK_pad)
    TXW = TX * W
    g_pad = pl.pallas_call(
        _geom_kernel,
        out_shape=jax.ShapeDtypeStruct((NBK_pad, H * W), jnp.float32),
        grid=(H // TX, NBK_pad // TM),                         # x outer, rows inner
        in_specs=[
            pl.BlockSpec((TM, H), lambda xi, mi: (mi, 0)),     # GA row tile (full H)
            pl.BlockSpec((TM, W), lambda xi, mi: (mi, 0)),     # GB row tile (full W)
            pl.BlockSpec((H, TXW), lambda xi, mi: (0, xi)),    # E_A column tile
            pl.BlockSpec((W, TXW), lambda xi, mi: (0, xi)),    # E_B column tile
        ],
        out_specs=pl.BlockSpec((TM, TXW), lambda xi, mi: (mi, xi)),
        compiler_params=pltpu.CompilerParams(
            dimension_semantics=("parallel", "parallel"),
            vmem_limit_bytes=32 * 1024 * 1024),
    )(GA, GB, E_A, E_B)                                        # (NBK_pad, HW) f32

    g = g_pad[:NBK].reshape(NB, K, H, W)                       # per-box (49, H, W)

    # ---- matching loop of GeometricTerm.forward (pure Python glue) ---------- #
    geometric_output = []
    for i in range(N):
        for bi in range(NB):
            if int(box_idx[bi]) == i:
                geometric_output.append((jnp.int32(i), g[bi]))
    return geometric_output


# --------------------------------------------------------------------------- #
# Pure-JAX reference (sanity check only)
# --------------------------------------------------------------------------- #
def geometric_term_reference(x, rois, params):
    N, _, H, W = x.shape
    V_box, W_box, W_im = params["V_box"], params["W_box"], params["W_im"]
    rois = jnp.asarray(rois, jnp.float32)
    NB = rois.shape[0]
    eps = sinusoid_embedding(rois[:, 1:5], INPUT_DIM).reshape(NB, 4 * INPUT_DIM)
    b = jnp.einsum("ij,nj->ni", V_box, eps, precision=_HIGHEST)        # (NB, 512)
    u = jnp.einsum("koj,nj->nko", W_box, b, precision=_HIGHEST)        # (NB, 49, 256)
    embH = sinusoid_embedding(jnp.arange(H), INPUT_DIM)
    embW = sinusoid_embedding(jnp.arange(W), INPUT_DIM)
    pos = jnp.concatenate(
        [jnp.broadcast_to(embH[:, None, :], (H, W, INPUT_DIM)),
         jnp.broadcast_to(embW[None, :, :], (H, W, INPUT_DIM))], axis=-1)
    p = jnp.einsum("oj,xyj->xyo", W_im, pos, precision=_HIGHEST)       # (H, W, 256)
    return jnp.einsum("nko,xyo->nkxy", u, p, precision=_HIGHEST)       # (NB, 49, H, W)


# --------------------------------------------------------------------------- #
if __name__ == "__main__":
    key = jax.random.PRNGKey(0)
    kx, k1, k2, k3 = jax.random.split(key, 4)

    # Small shapes consistent with the module: batch=2, channels=4, spatial=16x16.
    N, C, H, W = 2, 4, 16, 16
    x = jax.random.normal(kx, (N, C, H, W), jnp.float32)   # values unused (shape only)
    rois = jnp.array([[0.0, 2.1, 2.3, 3.5, 3.8],
                      [1.0, 2.2, 2.4, 3.5, 3.9]], jnp.float32)

    # Deterministic parameter init (torch.randn equivalents).
    params = {
        "V_box": jax.random.normal(k1, (INPUT_DIM, 4 * INPUT_DIM), jnp.float32),
        "W_box": jax.random.normal(k2, (K, OUTPUT_DIM, INPUT_DIM), jnp.float32),
        "W_im": jax.random.normal(k3, (OUTPUT_DIM, 2 * INPUT_DIM), jnp.float32),
    }
    params = prepare_geometric_params(params)   # one-time transpose+cast of W_box

    out = geometric_term_pallas(x, rois, params)
    for _, gmap in out:
        jax.block_until_ready(gmap)

    # Sanity check against a pure-JAX reference (loose tol: bf16 MXU operands;
    # expect ~1e-3..1e-2 relative error vs the f32 PyTorch module).
    ref = geometric_term_reference(x, rois, params)
    box_idx = np.asarray(rois[:, 0]).astype(np.int64)
    for idx, gmap in out:
        bi = int(np.where(box_idx == int(idx))[0][0])
        rel = jnp.linalg.norm(gmap - ref[bi]) / jnp.linalg.norm(ref[bi])
        assert float(rel) < 5e-2, f"kernel mismatch, rel err {float(rel)}"
        assert gmap.shape == (K, H, W)

    # TODO(synk): torchvision's _assert_has_ops()/check_roi_boxes_shape() validation is skipped.
    print("KERNEL_OK")
</pallas_src>

<mosaic_0001>
module attributes {stable_mosaic.version = 11 : i64} {
  func.func @_box_kernel(%arg0: i32, %arg1: memref<16x512xbf16, #tpu.memory_space<vmem>>, %arg2: memref<512x1792xbf16, #tpu.memory_space<vmem>>, %arg3: memref<16x1792xbf16, #tpu.memory_space<vmem>>) attributes {dimension_semantics = [#tpu.dimension_semantics<parallel>], iteration_bounds = array<i64: 7>, scalar_prefetch = 0 : i64, scratch_operands = 0 : i64, tpu.core_type = #tpu.core_type<tc>, window_params = [{pipeline_mode = #tpu.pipeline_mode<synchronous>, transform_indices = @transform_0, window_bounds = array<i64: 16, 512>}, {transform_indices = @transform_1, window_bounds = array<i64: 512, 1792>}, {transform_indices = @transform_2, window_bounds = array<i64: 16, 1792>}]} {
    %c0 = arith.constant 0 : index
    %c0_0 = arith.constant 0 : index
    %0 = vector.load %arg1[%c0, %c0_0] : memref<16x512xbf16, #tpu.memory_space<vmem>>, vector<16x512xbf16>
    %c0_1 = arith.constant 0 : index
    %c0_2 = arith.constant 0 : index
    %1 = vector.load %arg2[%c0_1, %c0_2] : memref<512x1792xbf16, #tpu.memory_space<vmem>>, vector<512x1792xbf16>
    %cst = arith.constant dense<0.000000e+00> : vector<16x1792xf32>
    %2 = tpu.matmul %0, %1, %cst {dimension_numbers = #tpu.dot_dimension_numbers<[1], [0], [0], [1], [0, 0, 1, 1], [], []>} : vector<16x512xbf16>, vector<512x1792xbf16>, vector<16x1792xf32> -> vector<16x1792xf32>
    %3 = arith.truncf %2 : vector<16x1792xf32> to vector<16x1792xbf16>
    %c0_3 = arith.constant 0 : index
    %c0_4 = arith.constant 0 : index
    %4 = vector.load %arg3[%c0_3, %c0_4] : memref<16x1792xbf16, #tpu.memory_space<vmem>>, vector<16x1792xbf16>
    tpu.vector_store %arg3[%c0_3, %c0_4], %3 {strides = array<i32>} : memref<16x1792xbf16, #tpu.memory_space<vmem>>, vector<16x1792xbf16>,
    return
  }
  func.func @transform_0(%arg0: i32) -> (i32, i32) {
    %c0_i32 = arith.constant 0 : i32
    %c0_i32_0 = arith.constant 0 : i32
    %c0_i32_1 = arith.constant 0 : i32
    return %c0_i32, %c0_i32_0 : i32, i32
  }
  func.func @transform_1(%arg0: i32) -> (i32, i32) {
    %c0_i32 = arith.constant 0 : i32
    %c0_i32_0 = arith.constant 0 : i32
    return %c0_i32, %arg0 : i32, i32
  }
  func.func @transform_2(%arg0: i32) -> (i32, i32) {
    %c0_i32 = arith.constant 0 : i32
    %c0_i32_0 = arith.constant 0 : i32
    return %c0_i32, %arg0 : i32, i32
  }
}

</mosaic_0001>

<llo_original>
// kernel: tpu_custom_call.1
$region0: #{tpu_custom_call.1}
  #allocation0 [shape = 'u32[]', space=smem, size = 0x4, offset = 0x4, fixed_abs, tag = 'smem constant byte address 0x4 - core index']
  #allocation1 [shape = 'u32[144,128]{1,0:T(1,128)}', space=vmem, size = 0x12000, scoped, tag = 'internal scratch']
  %s0 = inlined_call_operand.hbm [shape: bf16[16,512], index: 0, kind: input, shape index: {}]
  %s1 = inlined_call_operand.hbm [shape: bf16[512,12544], index: 1, kind: input, shape index: {}]
  %s2 = inlined_call_operand.hbm [shape: bf16[16,12544], index: 2, kind: output, shape index: {}]
  %s3 = sld [smem:[#allocation0]]
  $region49: #{tpu_custom_call.1} parent=0
    _
  %s5 = ssub.s32 1, %s3
  %s6 = scalar_select 0, %s5, %s3
  $region1: #{tpu_custom_call.1} parent=0
    #allocation2 [shape = 'u8[16384]{0}', space=vmem, size = 0x4000, scoped, tag = 'input window, operand 0, single buffered']
    #allocation3 [shape = 's32[2]{0}', space=sflag, size = 0x8, scoped, tag = 'scoped memory for tpu_custom_call.1']
    #allocation4 [shape = 's32[2]{0}', space=sflag, size = 0x8, scoped, tag = 'scoped memory for tpu_custom_call.1']
    #allocation5 [shape = 'u8[3670016]{0}', space=vmem, size = 0x380000, scoped, tag = 'input window, operand 1']
    #allocation6 [shape = 's32[2]{0}', space=sflag, size = 0x8, scoped, tag = 'scoped memory for tpu_custom_call.1']
    #allocation7 [shape = 'u8[114688]{0}', space=vmem, size = 0x1c000, scoped, tag = 'output window, operand 0']
    %7 = vsyncpa [#allocation3], 0
    %8 = vsyncpa [#allocation6], 0
    %s9 = scalar_lea.sflag [#allocation6], 1
    %10 = vsyncpa %s9, 0
    %11 = vsyncpa [#allocation4], 0
    %s12 = scalar_lea.sflag [#allocation4], 1
    %13 = vsyncpa %s12, 0
    loop: start=0, step=1, limit=9
    $region2: #{tpu_custom_call.1} parent=1 // loop_pre_header
      _
    $region3: #{tpu_custom_call.1} parent=1 // loop_header
      %s15 = sphi 0, %s19
      %p16 = scmp.ge.s32.totalorder %s15, 9
      %s23 = sphi 0, %s23
      %s25 = sphi 0, %s23
      %s26 = sphi 0, %s25
      %s40 = sphi 0, %s26
      %s46 = sphi 0, %s48
      %s49 = sphi 0, %s46
      %s50 = sphi 0, %s49
      %s66 = sphi 0, %s50
      %s72 = sphi 0, %s74
      %s75 = sphi 0, %s72
      %s76 = sphi 0, %s75
      %s92 = sphi 0, %s76
    $region4: #{tpu_custom_call.1} parent=1 // loop_header_branch
      %18 = sbr.rel (%p16) target = $region8
    $region5: #{tpu_custom_call.1} parent=1 // loop_body
      %s20 = ssub.s32 %s15, 1
      %s21 = ssub.s32 %s15, 2
      %s22 = sadd.s32 %s15, 1
      %s24 = sadd.s32 %s23, 1
      %p27 = scmp.eq.s32.totalorder %s15, 6
      %p28 = scmp.ne.s32.totalorder %s23, %s25
      %p29 = scmp.eq.s32.totalorder %s15, 0
      %p30 = por %p28, %p29
      %p31 = scmp.ne.s32.totalorder %s23, %s25
      %p32 = scmp.eq.s32.totalorder %s20, 6
      %p33 = por %p31, %p32
      %p34 = scmp.ne.s32.totalorder %s25, %s26
      %p35 = scmp.eq.s32.totalorder %s20, 0
      %p36 = por %p34, %p35
      %p37 = scmp.ne.s32.totalorder %s25, %s26
      %p38 = scmp.eq.s32.totalorder %s21, 6
      %p39 = por %p37, %p38
      %p41 = scmp.ne.s32.totalorder %s26, %s40
      %p42 = scmp.eq.s32.totalorder %s21, 0
      %p43 = por %p41, %p42
      %s44 = ssub.s32 %s15, %s22
      %p45 = scmp.eq.s32.totalorder %s44, 0
      %s47 = sadd.s32 %s46, 1
      %s48 = scalar_select %p45, %s46, %s47
      %p51 = pneg %p45
      %p52 = scmp.eq.s32.totalorder %s15, 6
      %p53 = por %p51, %p52
      %p54 = scmp.ne.s32.totalorder %s46, %s49
      %p55 = scmp.eq.s32.totalorder %s15, 0
      %p56 = por %p54, %p55
      %p57 = scmp.ne.s32.totalorder %s46, %s49
      %p58 = scmp.eq.s32.totalorder %s20, 6
      %p59 = por %p57, %p58
      %p60 = scmp.ne.s32.totalorder %s49, %s50
      %p61 = scmp.eq.s32.totalorder %s20, 0
      %p62 = por %p60, %p61
      %p63 = scmp.ne.s32.totalorder %s49, %s50
      %p64 = scmp.eq.s32.totalorder %s21, 6
      %p65 = por %p63, %p64
      %p67 = scmp.ne.s32.totalorder %s50, %s66
      %p68 = scmp.eq.s32.totalorder %s21, 0
      %p69 = por %p67, %p68
      %s70 = ssub.s32 %s15, %s22
      %p71 = scmp.eq.s32.totalorder %s70, 0
      %s73 = sadd.s32 %s72, 1
      %s74 = scalar_select %p71, %s72, %s73
      %p77 = pneg %p71
      %p78 = scmp.eq.s32.totalorder %s15, 6
      %p79 = por %p77, %p78
      %p80 = scmp.ne.s32.totalorder %s72, %s75
      %p81 = scmp.eq.s32.totalorder %s15, 0
      %p82 = por %p80, %p81
      %p83 = scmp.ne.s32.totalorder %s72, %s75
      %p84 = scmp.eq.s32.totalorder %s20, 6
      %p85 = por %p83, %p84
      %p86 = scmp.ne.s32.totalorder %s75, %s76
      %p87 = scmp.eq.s32.totalorder %s20, 0
      %p88 = por %p86, %p87
      %p89 = scmp.ne.s32.totalorder %s75, %s76
      %p90 = scmp.eq.s32.totalorder %s21, 6
      %p91 = por %p89, %p90
      %p93 = scmp.ne.s32.totalorder %s76, %s92
      %p94 = scmp.eq.s32.totalorder %s21, 0
      %p95 = por %p93, %p94
      %p96 = scmp.le.s32.totalorder 1, %s15
      %p97 = scmp.lt.s32.totalorder %s15, 8
      %p98 = pnand %p96, %p97
      %p99 = pneg %p98
      // Predicated region
      $region9: #{tpu_custom_call.1} parent=5 // pred_check
        _
      $region10: #{tpu_custom_call.1} parent=5 // pred_check_branch
        %101 = sbr.rel (%p98) target = $region12
      $region11: #{tpu_custom_call.1} parent=5 // pred_region
        %s102 = ssub.s32 %s15, 1
        // Predicated region
        $region13: #{tpu_custom_call.1} parent=11 // pred_check
          %p103 = pneg %p36
        $region14: #{tpu_custom_call.1} parent=11 // pred_check_branch
          %105 = sbr.rel (%p103) target = $region16
        $region15: #{tpu_custom_call.1} parent=11 // pred_region
          %s107 = ssub.s32 512, 512
          %108 = vsyncadd [#allocation3], %s107
          %s109 = sshll.u32 [#allocation2], 4
          %s110 = int_to_ptr.vmem [resolvable:$true] %s109
          %115 = dma.hbm_to_vmem [thread:$0]  %s0, 512, %s110, [#allocation3], 256, 256, 16
        $region16: #{tpu_custom_call.1} parent=11 // pred_fallthru
          _
      $region12: #{tpu_custom_call.1} parent=5 // pred_fallthru
        _
      %p116 = scmp.lt.s32.totalorder %s15, 7
      // Predicated region
      $region17: #{tpu_custom_call.1} parent=5 // pred_check
        %p117 = pneg %p116
      $region18: #{tpu_custom_call.1} parent=5 // pred_check_branch
        %119 = sbr.rel (%p117) target = $region20
      $region19: #{tpu_custom_call.1} parent=5 // pred_region
        // Predicated region
        $region21: #{tpu_custom_call.1} parent=19 // pred_check
          %p120 = pneg %p56
        $region22: #{tpu_custom_call.1} parent=19 // pred_check_branch
          %122 = sbr.rel (%p120) target = $region24
        $region23: #{tpu_custom_call.1} parent=19 // pred_region
          %s123 = sand.u32 %s46, 1
          %s124 = scalar_lea.sflag [#allocation6], %s123
          %s125 = sand.u32 %s46, 1
          %s126 = smul.addr %s125, 3584
          %s127 = scalar_lea.vmem [#allocation5], %s126
          %s128 = smul.u32 14, %s15
          %s130 = ssub.s32 57344, 57344
          %131 = vsyncadd %s124, %s130
          %s132 = smul.addr %s128, 64
          %s133 = scalar_lea.hbm %s1, %s132
          %s134 = sshll.u32 %s127, 4
          %s135 = int_to_ptr.vmem [resolvable:$true] %s134
          %140 = dma.hbm_to_vmem [thread:$0]  %s133, 57344, %s135, %s124, 6272, 896, 56
        $region24: #{tpu_custom_call.1} parent=19 // pred_fallthru
          _
      $region20: #{tpu_custom_call.1} parent=5 // pred_fallthru
        _
      %p141 = scmp.le.s32.totalorder 1, %s15
      %p142 = scmp.lt.s32.totalorder %s15, 8
      %p143 = pnand %p141, %p142
      %p144 = pneg %p143
      // Predicated region
      $region25: #{tpu_custom_call.1} parent=5 // pred_check
        _
      $region26: #{tpu_custom_call.1} parent=5 // pred_check_branch
        %146 = sbr.rel (%p143) target = $region28
      $region27: #{tpu_custom_call.1} parent=5 // pred_region
        %s147 = ssub.s32 %s15, 1
        // Predicated region
        $region29: #{tpu_custom_call.1} parent=27 // pred_check
          %p148 = pneg %p36
        $region30: #{tpu_custom_call.1} parent=27 // pred_check_branch
          %150 = sbr.rel (%p148) target = $region32
        $region31: #{tpu_custom_call.1} parent=27 // pred_region
          %151 = dma.done [#allocation3], 512
        $region32: #{tpu_custom_call.1} parent=27 // pred_fallthru
          _
        %s152 = sand.u32 %s49, 1
        %s153 = scalar_lea.sflag [#allocation6], %s152
        %s154 = sand.u32 %s49, 1
        %s155 = smul.addr %s154, 3584
        %s156 = scalar_lea.vmem [#allocation5], %s155
        // Predicated region
        $region33: #{tpu_custom_call.1} parent=27 // pred_check
          %p157 = pneg %p62
        $region34: #{tpu_custom_call.1} parent=27 // pred_check_branch
          %159 = sbr.rel (%p157) target = $region36
        $region35: #{tpu_custom_call.1} parent=27 // pred_region
          %160 = dma.done %s153, 57344
        $region36: #{tpu_custom_call.1} parent=27 // pred_fallthru
          _
        %p161 = pneg %p36
        %p162 = pneg %p33
        %s163 = sand.u32 %s49, 1
        %s164 = scalar_lea.sflag [#allocation6], %s163
        %s165 = sand.u32 %s49, 1
        %s166 = smul.addr %s165, 3584
        %s167 = scalar_lea.vmem [#allocation5], %s166
        %p168 = pneg %p62
        %p169 = pneg %p59
        %p170 = pneg %p88
        %p171 = pneg %p85
        %s172 = sand.u32 %s75, 1
        %s173 = scalar_lea.sflag [#allocation4], %s172
        %s174 = sand.u32 %s75, 1
        %s175 = smul.addr %s174, 112
        %s176 = scalar_lea.vmem [#allocation7], %s175
        %s177 = smul.u32 14, %s20
        %s178 = smul.u32 14, %s20
        %v179 = vld [vmem:[#allocation2] sm:$0xff]
        %v180 = vld [vmem:[#allocation2 + $0x8] sm:$0xff]
        %v181 = vld [vmem:[#allocation2 + $0x10] sm:$0xff]
        %v182 = vld [vmem:[#allocation2 + $0x18] sm:$0xff]
        %v183 = vld [vmem:[%s156] sm:$0xff]
        %v184 = vld [vmem:[%s156 + $0x8] sm:$0xff]
        %v185 = vld [vmem:[%s156 + $0x10] sm:$0xff]
        %v186 = vld [vmem:[%s156 + $0x18] sm:$0xff]
        %v187 = vld [vmem:[%s156 + $0x20] sm:$0xff]
        %v188 = vld [vmem:[%s156 + $0x28] sm:$0xff]
        %v189 = vld [vmem:[%s156 + $0x30] sm:$0xff]
        %v190 = vld [vmem:[%s156 + $0x38] sm:$0xff]
        %v191 = vld [vmem:[%s156 + $0x40] sm:$0xff]
        %v192 = vld [vmem:[%s156 + $0x48] sm:$0xff]
        %v193 = vld [vmem:[%s156 + $0x50] sm:$0xff]
        %v194 = vld [vmem:[%s156 + $0x58] sm:$0xff]
        %v195 = vld [vmem:[%s156 + $0x60] sm:$0xff]
        %v196 = vld [vmem:[%s156 + $0x68] sm:$0xff]
        %v197 = vld [vmem:[%s156 + $0x70] sm:$0xff]
        %v198 = vld [vmem:[%s156 + $0x78] sm:$0xff]
        %v199 = vld [vmem:[%s156 + $0x80] sm:$0xff]
        %v200 = vld [vmem:[%s156 + $0x88] sm:$0xff]
        %v201 = vld [vmem:[%s156 + $0x90] sm:$0xff]
        %v202 = vld [vmem:[%s156 + $0x98] sm:$0xff]
        %v203 = vld [vmem:[%s156 + $0xa0] sm:$0xff]
        %v204 = vld [vmem:[%s156 + $0xa8] sm:$0xff]
        %v205 = vld [vmem:[%s156 + $0xb0] sm:$0xff]
        %v206 = vld [vmem:[%s156 + $0xb8] sm:$0xff]
        %v207 = vld [vmem:[%s156 + $0xc0] sm:$0xff]
        %v208 = vld [vmem:[%s156 + $0xc8] sm:$0xff]
        %v209 = vld [vmem:[%s156 + $0xd0] sm:$0xff]
        %v210 = vld [vmem:[%s156 + $0xd8] sm:$0xff]
        %v211 = vld [vmem:[%s156 + $0xe0] sm:$0xff]
        %v212 = vld [vmem:[%s156 + $0xe8] sm:$0xff]
        %v213 = vld [vmem:[%s156 + $0xf0] sm:$0xff]
        %v214 = vld [vmem:[%s156 + $0xf8] sm:$0xff]
        %v215 = vld [vmem:[%s156 + $0x100] sm:$0xff]
        %v216 = vld [vmem:[%s156 + $0x108] sm:$0xff]
        %v217 = vld [vmem:[%s156 + $0x110] sm:$0xff]
        %v218 = vld [vmem:[%s156 + $0x118] sm:$0xff]
        %v219 = vld [vmem:[%s156 + $0x120] sm:$0xff]
        %v220 = vld [vmem:[%s156 + $0x128] sm:$0xff]
        %v221 = vld [vmem:[%s156 + $0x130] sm:$0xff]
        %v222 = vld [vmem:[%s156 + $0x138] sm:$0xff]
        %v223 = vld [vmem:[%s156 + $0x140] sm:$0xff]
        %v224 = vld [vmem:[%s156 + $0x148] sm:$0xff]
        %v225 = vld [vmem:[%s156 + $0x150] sm:$0xff]
        %v226 = vld [vmem:[%s156 + $0x158] sm:$0xff]
        %v227 = vld [vmem:[%s156 + $0x160] sm:$0xff]
        %v228 = vld [vmem:[%s156 + $0x168] sm:$0xff]
        %v229 = vld [vmem:[%s156 + $0x170] sm:$0xff]
        %v230 = vld [vmem:[%s156 + $0x178] sm:$0xff]
        %v231 = vld [vmem:[%s156 + $0x180] sm:$0xff]
        %v232 = vld [vmem:[%s156 + $0x188] sm:$0xff]
        %v233 = vld [vmem:[%s156 + $0x190] sm:$0xff]
        %v234 = vld [vmem:[%s156 + $0x198] sm:$0xff]
        %v235 = vld [vmem:[%s156 + $0x1a0] sm:$0xff]
        %v236 = vld [vmem:[%s156 + $0x1a8] sm:$0xff]
        %v237 = vld [vmem:[%s156 + $0x1b0] sm:$0xff]
        %v238 = vld [vmem:[%s156 + $0x1b8] sm:$0xff]
        %v239 = vld [vmem:[%s156 + $0x1c0] sm:$0xff]
        %v240 = vld [vmem:[%s156 + $0x1c8] sm:$0xff]
        %v241 = vld [vmem:[%s156 + $0x1d0] sm:$0xff]
        %v242 = vld [vmem:[%s156 + $0x1d8] sm:$0xff]
        %v243 = vld [vmem:[%s156 + $0x1e0] sm:$0xff]
        %v244 = vld [vmem:[%s156 + $0x1e8] sm:$0xff]
        %v245 = vld [vmem:[%s156 + $0x1f0] sm:$0xff]
        %v246 = vld [vmem:[%s156 + $0x1f8] sm:$0xff]
        %v247 = vld [vmem:[%s156 + $0x200] sm:$0xff]
        %v248 = vld [vmem:[%s156 + $0x208] sm:$0xff]
        %v249 = vld [vmem:[%s156 + $0x210] sm:$0xff]
        %v250 = vld [vmem:[%s156 + $0x218] sm:$0xff]
        %v251 = vld [vmem:[%s156 + $0x220] sm:$0xff]
        %v252 = vld [vmem:[%s156 + $0x228] sm:$0xff]
        %v253 = vld [vmem:[%s156 + $0x230] sm:$0xff]
        %v254 = vld [vmem:[%s156 + $0x238] sm:$0xff]
        %v255 = vld [vmem:[%s156 + $0x240] sm:$0xff]
        %v256 = vld [vmem:[%s156 + $0x248] sm:$0xff]
        %v257 = vld [vmem:[%s156 + $0x250] sm:$0xff]
        %v258 = vld [vmem:[%s156 + $0x258] sm:$0xff]
        %v259 = vld [vmem:[%s156 + $0x260] sm:$0xff]
        %v260 = vld [vmem:[%s156 + $0x268] sm:$0xff]
        %v261 = vld [vmem:[%s156 + $0x270] sm:$0xff]
        %v262 = vld [vmem:[%s156 + $0x278] sm:$0xff]
        %v263 = vld [vmem:[%s156 + $0x280] sm:$0xff]
        %v264 = vld [vmem:[%s156 + $0x288] sm:$0xff]
        %v265 = vld [vmem:[%s156 + $0x290] sm:$0xff]
        %v266 = vld [vmem:[%s156 + $0x298] sm:$0xff]
        %v267 = vld [vmem:[%s156 + $0x2a0] sm:$0xff]
        %v268 = vld [vmem:[%s156 + $0x2a8] sm:$0xff]
        %v269 = vld [vmem:[%s156 + $0x2b0] sm:$0xff]
        %v270 = vld [vmem:[%s156 + $0x2b8] sm:$0xff]
        %v271 = vld [vmem:[%s156 + $0x2c0] sm:$0xff]
        %v272 = vld [vmem:[%s156 + $0x2c8] sm:$0xff]
        %v273 = vld [vmem:[%s156 + $0x2d0] sm:$0xff]
        %v274 = vld [vmem:[%s156 + $0x2d8] sm:$0xff]
        %v275 = vld [vmem:[%s156 + $0x2e0] sm:$0xff]
        %v276 = vld [vmem:[%s156 + $0x2e8] sm:$0xff]
        %v277 = vld [vmem:[%s156 + $0x2f0] sm:$0xff]
        %v278 = vld [vmem:[%s156 + $0x2f8] sm:$0xff]
        %v279 = vld [vmem:[%s156 + $0x300] sm:$0xff]
        %v280 = vld [vmem:[%s156 + $0x308] sm:$0xff]
        %v281 = vld [vmem:[%s156 + $0x310] sm:$0xff]
        %v282 = vld [vmem:[%s156 + $0x318] sm:$0xff]
        %v283 = vld [vmem:[%s156 + $0x320] sm:$0xff]
        %v284 = vld [vmem:[%s156 + $0x328] sm:$0xff]
        %v285 = vld [vmem:[%s156 + $0x330] sm:$0xff]
        %v286 = vld [vmem:[%s156 + $0x338] sm:$0xff]
        %v287 = vld [vmem:[%s156 + $0x340] sm:$0xff]
        %v288 = vld [vmem:[%s156 + $0x348] sm:$0xff]
        %v289 = vld [vmem:[%s156 + $0x350] sm:$0xff]
        %v290 = vld [vmem:[%s156 + $0x358] sm:$0xff]
        %v291 = vld [vmem:[%s156 + $0x360] sm:$0xff]
        %v292 = vld [vmem:[%s156 + $0x368] sm:$0xff]
        %v293 = vld [vmem:[%s156 + $0x370] sm:$0xff]
        %v294 = vld [vmem:[%s156 + $0x378] sm:$0xff]
        %v295 = vld [vmem:[%s156 + $0x380] sm:$0xff]
        %v296 = vld [vmem:[%s156 + $0x388] sm:$0xff]
        %v297 = vld [vmem:[%s156 + $0x390] sm:$0xff]
        %v298 = vld [vmem:[%s156 + $0x398] sm:$0xff]
        %v299 = vld [vmem:[%s156 + $0x3a0] sm:$0xff]
        %v300 = vld [vmem:[%s156 + $0x3a8] sm:$0xff]
        %v301 = vld [vmem:[%s156 + $0x3b0] sm:$0xff]
        %v302 = vld [vmem:[%s156 + $0x3b8] sm:$0xff]
        %v303 = vld [vmem:[%s156 + $0x3c0] sm:$0xff]
        %v304 = vld [vmem:[%s156 + $0x3c8] sm:$0xff]
        %v305 = vld [vmem:[%s156 + $0x3d0] sm:$0xff]
        %v306 = vld [vmem:[%s156 + $0x3d8] sm:$0xff]
        %v307 = vld [vmem:[%s156 + $0x3e0] sm:$0xff]
        %v308 = vld [vmem:[%s156 + $0x3e8] sm:$0xff]
        %v309 = vld [vmem:[%s156 + $0x3f0] sm:$0xff]
        %v310 = vld [vmem:[%s156 + $0x3f8] sm:$0xff]
        %v311 = vld [vmem:[%s156 + $0x400] sm:$0xff]
        %v312 = vld [vmem:[%s156 + $0x408] sm:$0xff]
        %v313 = vld [vmem:[%s156 + $0x410] sm:$0xff]
        %v314 = vld [vmem:[%s156 + $0x418] sm:$0xff]
        %v315 = vld [vmem:[%s156 + $0x420] sm:$0xff]
        %v316 = vld [vmem:[%s156 + $0x428] sm:$0xff]
        %v317 = vld [vmem:[%s156 + $0x430] sm:$0xff]
        %v318 = vld [vmem:[%s156 + $0x438] sm:$0xff]
        %v319 = vld [vmem:[%s156 + $0x440] sm:$0xff]
        %v320 = vld [vmem:[%s156 + $0x448] sm:$0xff]
        %v321 = vld [vmem:[%s156 + $0x450] sm:$0xff]
        %v322 = vld [vmem:[%s156 + $0x458] sm:$0xff]
        %v323 = vld [vmem:[%s156 + $0x460] sm:$0xff]
        %v324 = vld [vmem:[%s156 + $0x468] sm:$0xff]
        %v325 = vld [vmem:[%s156 + $0x470] sm:$0xff]
        %v326 = vld [vmem:[%s156 + $0x478] sm:$0xff]
        %v327 = vld [vmem:[%s156 + $0x480] sm:$0xff]
        %v328 = vld [vmem:[%s156 + $0x488] sm:$0xff]
        %v329 = vld [vmem:[%s156 + $0x490] sm:$0xff]
        %v330 = vld [vmem:[%s156 + $0x498] sm:$0xff]
        %v331 = vld [vmem:[%s156 + $0x4a0] sm:$0xff]
        %v332 = vld [vmem:[%s156 + $0x4a8] sm:$0xff]
        %v333 = vld [vmem:[%s156 + $0x4b0] sm:$0xff]
        %v334 = vld [vmem:[%s156 + $0x4b8] sm:$0xff]
        %v335 = vld [vmem:[%s156 + $0x4c0] sm:$0xff]
        %v336 = vld [vmem:[%s156 + $0x4c8] sm:$0xff]
        %v337 = vld [vmem:[%s156 + $0x4d0] sm:$0xff]
        %v338 = vld [vmem:[%s156 + $0x4d8] sm:$0xff]
        %v339 = vld [vmem:[%s156 + $0x4e0] sm:$0xff]
        %v340 = vld [vmem:[%s156 + $0x4e8] sm:$0xff]
        %v341 = vld [vmem:[%s156 + $0x4f0] sm:$0xff]
        %v342 = vld [vmem:[%s156 + $0x4f8] sm:$0xff]
        %v343 = vld [vmem:[%s156 + $0x500] sm:$0xff]
        %v344 = vld [vmem:[%s156 + $0x508] sm:$0xff]
        %v345 = vld [vmem:[%s156 + $0x510] sm:$0xff]
        %v346 = vld [vmem:[%s156 + $0x518] sm:$0xff]
        %v347 = vld [vmem:[%s156 + $0x520] sm:$0xff]
        %v348 = vld [vmem:[%s156 + $0x528] sm:$0xff]
        %v349 = vld [vmem:[%s156 + $0x530] sm:$0xff]
        %v350 = vld [vmem:[%s156 + $0x538] sm:$0xff]
        %v351 = vld [vmem:[%s156 + $0x540] sm:$0xff]
        %v352 = vld [vmem:[%s156 + $0x548] sm:$0xff]
        %v353 = vld [vmem:[%s156 + $0x550] sm:$0xff]
        %v354 = vld [vmem:[%s156 + $0x558] sm:$0xff]
        %v355 = vld [vmem:[%s156 + $0x560] sm:$0xff]
        %v356 = vld [vmem:[%s156 + $0x568] sm:$0xff]
        %v357 = vld [vmem:[%s156 + $0x570] sm:$0xff]
        %v358 = vld [vmem:[%s156 + $0x578] sm:$0xff]
        %v359 = vld [vmem:[%s156 + $0x580] sm:$0xff]
        %v360 = vld [vmem:[%s156 + $0x588] sm:$0xff]
        %v361 = vld [vmem:[%s156 + $0x590] sm:$0xff]
        %v362 = vld [vmem:[%s156 + $0x598] sm:$0xff]
        %v363 = vld [vmem:[%s156 + $0x5a0] sm:$0xff]
        %v364 = vld [vmem:[%s156 + $0x5a8] sm:$0xff]
        %v365 = vld [vmem:[%s156 + $0x5b0] sm:$0xff]
        %v366 = vld [vmem:[%s156 + $0x5b8] sm:$0xff]
        %v367 = vld [vmem:[%s156 + $0x5c0] sm:$0xff]
        %v368 = vld [vmem:[%s156 + $0x5c8] sm:$0xff]
        %v369 = vld [vmem:[%s156 + $0x5d0] sm:$0xff]
        %v370 = vld [vmem:[%s156 + $0x5d8] sm:$0xff]
        %v371 = vld [vmem:[%s156 + $0x5e0] sm:$0xff]
        %v372 = vld [vmem:[%s156 + $0x5e8] sm:$0xff]
        %v373 = vld [vmem:[%s156 + $0x5f0] sm:$0xff]
        %v374 = vld [vmem:[%s156 + $0x5f8] sm:$0xff]
        %v375 = vld [vmem:[%s156 + $0x600] sm:$0xff]
        %v376 = vld [vmem:[%s156 + $0x608] sm:$0xff]
        %v377 = vld [vmem:[%s156 + $0x610] sm:$0xff]
        %v378 = vld [vmem:[%s156 + $0x618] sm:$0xff]
        %v379 = vld [vmem:[%s156 + $0x620] sm:$0xff]
        %v380 = vld [vmem:[%s156 + $0x628] sm:$0xff]
        %v381 = vld [vmem:[%s156 + $0x630] sm:$0xff]
        %v382 = vld [vmem:[%s156 + $0x638] sm:$0xff]
        %v383 = vld [vmem:[%s156 + $0x640] sm:$0xff]
        %v384 = vld [vmem:[%s156 + $0x648] sm:$0xff]
        %v385 = vld [vmem:[%s156 + $0x650] sm:$0xff]
        %v386 = vld [vmem:[%s156 + $0x658] sm:$0xff]
        %v387 = vld [vmem:[%s156 + $0x660] sm:$0xff]
        %v388 = vld [vmem:[%s156 + $0x668] sm:$0xff]
        %v389 = vld [vmem:[%s156 + $0x670] sm:$0xff]
        %v390 = vld [vmem:[%s156 + $0x678] sm:$0xff]
        %v391 = vld [vmem:[%s156 + $0x680] sm:$0xff]
        %v392 = vld [vmem:[%s156 + $0x688] sm:$0xff]
        %v393 = vld [vmem:[%s156 + $0x690] sm:$0xff]
        %v394 = vld [vmem:[%s156 + $0x698] sm:$0xff]
        %v395 = vld [vmem:[%s156 + $0x6a0] sm:$0xff]
        %v396 = vld [vmem:[%s156 + $0x6a8] sm:$0xff]
        %v397 = vld [vmem:[%s156 + $0x6b0] sm:$0xff]
        %v398 = vld [vmem:[%s156 + $0x6b8] sm:$0xff]
        %v399 = vld [vmem:[%s156 + $0x6c0] sm:$0xff]
        %v400 = vld [vmem:[%s156 + $0x6c8] sm:$0xff]
        %v401 = vld [vmem:[%s156 + $0x6d0] sm:$0xff]
        %v402 = vld [vmem:[%s156 + $0x6d8] sm:$0xff]
        %v403 = vld [vmem:[%s156 + $0x6e0] sm:$0xff]
        %v404 = vld [vmem:[%s156 + $0x6e8] sm:$0xff]
        %v405 = vld [vmem:[%s156 + $0x6f0] sm:$0xff]
        %v406 = vld [vmem:[%s156 + $0x6f8] sm:$0xff]
        %v407 = vld [vmem:[%s156 + $0x700] sm:$0xff]
        %v408 = vld [vmem:[%s156 + $0x708] sm:$0xff]
        %v409 = vld [vmem:[%s156 + $0x710] sm:$0xff]
        %v410 = vld [vmem:[%s156 + $0x718] sm:$0xff]
        %v411 = vld [vmem:[%s156 + $0x720] sm:$0xff]
        %v412 = vld [vmem:[%s156 + $0x728] sm:$0xff]
        %v413 = vld [vmem:[%s156 + $0x730] sm:$0xff]
        %v414 = vld [vmem:[%s156 + $0x738] sm:$0xff]
        %v415 = vld [vmem:[%s156 + $0x740] sm:$0xff]
        %v416 = vld [vmem:[%s156 + $0x748] sm:$0xff]
        %v417 = vld [vmem:[%s156 + $0x750] sm:$0xff]
        %v418 = vld [vmem:[%s156 + $0x758] sm:$0xff]
        %v419 = vld [vmem:[%s156 + $0x760] sm:$0xff]
        %v420 = vld [vmem:[%s156 + $0x768] sm:$0xff]
        %v421 = vld [vmem:[%s156 + $0x770] sm:$0xff]
        %v422 = vld [vmem:[%s156 + $0x778] sm:$0xff]
        %v423 = vld [vmem:[%s156 + $0x780] sm:$0xff]
        %v424 = vld [vmem:[%s156 + $0x788] sm:$0xff]
        %v425 = vld [vmem:[%s156 + $0x790] sm:$0xff]
        %v426 = vld [vmem:[%s156 + $0x798] sm:$0xff]
        %v427 = vld [vmem:[%s156 + $0x7a0] sm:$0xff]
        %v428 = vld [vmem:[%s156 + $0x7a8] sm:$0xff]
        %v429 = vld [vmem:[%s156 + $0x7b0] sm:$0xff]
        %v430 = vld [vmem:[%s156 + $0x7b8] sm:$0xff]
        %v431 = vld [vmem:[%s156 + $0x7c0] sm:$0xff]
        %v432 = vld [vmem:[%s156 + $0x7c8] sm:$0xff]
        %v433 = vld [vmem:[%s156 + $0x7d0] sm:$0xff]
        %v434 = vld [vmem:[%s156 + $0x7d8] sm:$0xff]
        %v435 = vld [vmem:[%s156 + $0x7e0] sm:$0xff]
        %v436 = vld [vmem:[%s156 + $0x7e8] sm:$0xff]
        %v437 = vld [vmem:[%s156 + $0x7f0] sm:$0xff]
        %v438 = vld [vmem:[%s156 + $0x7f8] sm:$0xff]
        %v439 = vld [vmem:[%s156 + $0x800] sm:$0xff]
        %v440 = vld [vmem:[%s156 + $0x808] sm:$0xff]
        %v441 = vld [vmem:[%s156 + $0x810] sm:$0xff]
        %v442 = vld [vmem:[%s156 + $0x818] sm:$0xff]
        %v443 = vld [vmem:[%s156 + $0x820] sm:$0xff]
        %v444 = vld [vmem:[%s156 + $0x828] sm:$0xff]
        %v445 = vld [vmem:[%s156 + $0x830] sm:$0xff]
        %v446 = vld [vmem:[%s156 + $0x838] sm:$0xff]
        %v447 = vld [vmem:[%s156 + $0x840] sm:$0xff]
        %v448 = vld [vmem:[%s156 + $0x848] sm:$0xff]
        %v449 = vld [vmem:[%s156 + $0x850] sm:$0xff]
        %v450 = vld [vmem:[%s156 + $0x858] sm:$0xff]
        %v451 = vld [vmem:[%s156 + $0x860] sm:$0xff]
        %v452 = vld [vmem:[%s156 + $0x868] sm:$0xff]
        %v453 = vld [vmem:[%s156 + $0x870] sm:$0xff]
        %v454 = vld [vmem:[%s156 + $0x878] sm:$0xff]
        %v455 = vld [vmem:[%s156 + $0x880] sm:$0xff]
        %v456 = vld [vmem:[%s156 + $0x888] sm:$0xff]
        %v457 = vld [vmem:[%s156 + $0x890] sm:$0xff]
        %v458 = vld [vmem:[%s156 + $0x898] sm:$0xff]
        %v459 = vld [vmem:[%s156 + $0x8a0] sm:$0xff]
        %v460 = vld [vmem:[%s156 + $0x8a8] sm:$0xff]
        %v461 = vld [vmem:[%s156 + $0x8b0] sm:$0xff]
        %v462 = vld [vmem:[%s156 + $0x8b8] sm:$0xff]
        %v463 = vld [vmem:[%s156 + $0x8c0] sm:$0xff]
        %v464 = vld [vmem:[%s156 + $0x8c8] sm:$0xff]
        %v465 = vld [vmem:[%s156 + $0x8d0] sm:$0xff]
        %v466 = vld [vmem:[%s156 + $0x8d8] sm:$0xff]
        %v467 = vld [vmem:[%s156 + $0x8e0] sm:$0xff]
        %v468 = vld [vmem:[%s156 + $0x8e8] sm:$0xff]
        %v469 = vld [vmem:[%s156 + $0x8f0] sm:$0xff]
        %v470 = vld [vmem:[%s156 + $0x8f8] sm:$0xff]
        %v471 = vld [vmem:[%s156 + $0x900] sm:$0xff]
        %v472 = vld [vmem:[%s156 + $0x908] sm:$0xff]
        %v473 = vld [vmem:[%s156 + $0x910] sm:$0xff]
        %v474 = vld [vmem:[%s156 + $0x918] sm:$0xff]
        %v475 = vld [vmem:[%s156 + $0x920] sm:$0xff]
        %v476 = vld [vmem:[%s156 + $0x928] sm:$0xff]
        %v477 = vld [vmem:[%s156 + $0x930] sm:$0xff]
        %v478 = vld [vmem:[%s156 + $0x938] sm:$0xff]
        %v479 = vld [vmem:[%s156 + $0x940] sm:$0xff]
        %v480 = vld [vmem:[%s156 + $0x948] sm:$0xff]
        %v481 = vld [vmem:[%s156 + $0x950] sm:$0xff]
        %v482 = vld [vmem:[%s156 + $0x958] sm:$0xff]
        %v483 = vld [vmem:[%s156 + $0x960] sm:$0xff]
        %v484 = vld [vmem:[%s156 + $0x968] sm:$0xff]
        %v485 = vld [vmem:[%s156 + $0x970] sm:$0xff]
        %v486 = vld [vmem:[%s156 + $0x978] sm:$0xff]
        %v487 = vld [vmem:[%s156 + $0x980] sm:$0xff]
        %v488 = vld [vmem:[%s156 + $0x988] sm:$0xff]
        %v489 = vld [vmem:[%s156 + $0x990] sm:$0xff]
        %v490 = vld [vmem:[%s156 + $0x998] sm:$0xff]
        %v491 = vld [vmem:[%s156 + $0x9a0] sm:$0xff]
        %v492 = vld [vmem:[%s156 + $0x9a8] sm:$0xff]
        %v493 = vld [vmem:[%s156 + $0x9b0] sm:$0xff]
        %v494 = vld [vmem:[%s156 + $0x9b8] sm:$0xff]
        %v495 = vld [vmem:[%s156 + $0x9c0] sm:$0xff]
        %v496 = vld [vmem:[%s156 + $0x9c8] sm:$0xff]
        %v497 = vld [vmem:[%s156 + $0x9d0] sm:$0xff]
        %v498 = vld [vmem:[%s156 + $0x9d8] sm:$0xff]
        %v499 = vld [vmem:[%s156 + $0x9e0] sm:$0xff]
        %v500 = vld [vmem:[%s156 + $0x9e8] sm:$0xff]
        %v501 = vld [vmem:[%s156 + $0x9f0] sm:$0xff]
        %v502 = vld [vmem:[%s156 + $0x9f8] sm:$0xff]
        %v503 = vld [vmem:[%s156 + $0xa00] sm:$0xff]
        %v504 = vld [vmem:[%s156 + $0xa08] sm:$0xff]
        %v505 = vld [vmem:[%s156 + $0xa10] sm:$0xff]
        %v506 = vld [vmem:[%s156 + $0xa18] sm:$0xff]
        %v507 = vld [vmem:[%s156 + $0xa20] sm:$0xff]
        %v508 = vld [vmem:[%s156 + $0xa28] sm:$0xff]
        %v509 = vld [vmem:[%s156 + $0xa30] sm:$0xff]
        %v510 = vld [vmem:[%s156 + $0xa38] sm:$0xff]
        %v511 = vld [vmem:[%s156 + $0xa40] sm:$0xff]
        %v512 = vld [vmem:[%s156 + $0xa48] sm:$0xff]
        %v513 = vld [vmem:[%s156 + $0xa50] sm:$0xff]
        %v514 = vld [vmem:[%s156 + $0xa58] sm:$0xff]
        %v515 = vld [vmem:[%s156 + $0xa60] sm:$0xff]
        %v516 = vld [vmem:[%s156 + $0xa68] sm:$0xff]
        %v517 = vld [vmem:[%s156 + $0xa70] sm:$0xff]
        %v518 = vld [vmem:[%s156 + $0xa78] sm:$0xff]
        %v519 = vld [vmem:[%s156 + $0xa80] sm:$0xff]
        %v520 = vld [vmem:[%s156 + $0xa88] sm:$0xff]
        %v521 = vld [vmem:[%s156 + $0xa90] sm:$0xff]
        %v522 = vld [vmem:[%s156 + $0xa98] sm:$0xff]
        %v523 = vld [vmem:[%s156 + $0xaa0] sm:$0xff]
        %v524 = vld [vmem:[%s156 + $0xaa8] sm:$0xff]
        %v525 = vld [vmem:[%s156 + $0xab0] sm:$0xff]
        %v526 = vld [vmem:[%s156 + $0xab8] sm:$0xff]
        %v527 = vld [vmem:[%s156 + $0xac0] sm:$0xff]
        %v528 = vld [vmem:[%s156 + $0xac8] sm:$0xff]
        %v529 = vld [vmem:[%s156 + $0xad0] sm:$0xff]
        %v530 = vld [vmem:[%s156 + $0xad8] sm:$0xff]
        %v531 = vld [vmem:[%s156 + $0xae0] sm:$0xff]
        %v532 = vld [vmem:[%s156 + $0xae8] sm:$0xff]
        %v533 = vld [vmem:[%s156 + $0xaf0] sm:$0xff]
        %v534 = vld [vmem:[%s156 + $0xaf8] sm:$0xff]
        %v535 = vld [vmem:[%s156 + $0xb00] sm:$0xff]
        %v536 = vld [vmem:[%s156 + $0xb08] sm:$0xff]
        %v537 = vld [vmem:[%s156 + $0xb10] sm:$0xff]
        %v538 = vld [vmem:[%s156 + $0xb18] sm:$0xff]
        %v539 = vld [vmem:[%s156 + $0xb20] sm:$0xff]
        %v540 = vld [vmem:[%s156 + $0xb28] sm:$0xff]
        %v541 = vld [vmem:[%s156 + $0xb30] sm:$0xff]
        %v542 = vld [vmem:[%s156 + $0xb38] sm:$0xff]
        %v543 = vld [vmem:[%s156 + $0xb40] sm:$0xff]
        %v544 = vld [vmem:[%s156 + $0xb48] sm:$0xff]
        %v545 = vld [vmem:[%s156 + $0xb50] sm:$0xff]
        %v546 = vld [vmem:[%s156 + $0xb58] sm:$0xff]
        %v547 = vld [vmem:[%s156 + $0xb60] sm:$0xff]
        %v548 = vld [vmem:[%s156 + $0xb68] sm:$0xff]
        %v549 = vld [vmem:[%s156 + $0xb70] sm:$0xff]
        %v550 = vld [vmem:[%s156 + $0xb78] sm:$0xff]
        %v551 = vld [vmem:[%s156 + $0xb80] sm:$0xff]
        %v552 = vld [vmem:[%s156 + $0xb88] sm:$0xff]
        %v553 = vld [vmem:[%s156 + $0xb90] sm:$0xff]
        %v554 = vld [vmem:[%s156 + $0xb98] sm:$0xff]
        %v555 = vld [vmem:[%s156 + $0xba0] sm:$0xff]
        %v556 = vld [vmem:[%s156 + $0xba8] sm:$0xff]
        %v557 = vld [vmem:[%s156 + $0xbb0] sm:$0xff]
        %v558 = vld [vmem:[%s156 + $0xbb8] sm:$0xff]
        %v559 = vld [vmem:[%s156 + $0xbc0] sm:$0xff]
        %v560 = vld [vmem:[%s156 + $0xbc8] sm:$0xff]
        %v561 = vld [vmem:[%s156 + $0xbd0] sm:$0xff]
        %v562 = vld [vmem:[%s156 + $0xbd8] sm:$0xff]
        %v563 = vld [vmem:[%s156 + $0xbe0] sm:$0xff]
        %v564 = vld [vmem:[%s156 + $0xbe8] sm:$0xff]
        %v565 = vld [vmem:[%s156 + $0xbf0] sm:$0xff]
        %v566 = vld [vmem:[%s156 + $0xbf8] sm:$0xff]
        %v567 = vld [vmem:[%s156 + $0xc00] sm:$0xff]
        %v568 = vld [vmem:[%s156 + $0xc08] sm:$0xff]
        %v569 = vld [vmem:[%s156 + $0xc10] sm:$0xff]
        %v570 = vld [vmem:[%s156 + $0xc18] sm:$0xff]
        %v571 = vld [vmem:[%s156 + $0xc20] sm:$0xff]
        %v572 = vld [vmem:[%s156 + $0xc28] sm:$0xff]
        %v573 = vld [vmem:[%s156 + $0xc30] sm:$0xff]
        %v574 = vld [vmem:[%s156 + $0xc38] sm:$0xff]
        %v575 = vld [vmem:[%s156 + $0xc40] sm:$0xff]
        %v576 = vld [vmem:[%s156 + $0xc48] sm:$0xff]
        %v577 = vld [vmem:[%s156 + $0xc50] sm:$0xff]
        %v578 = vld [vmem:[%s156 + $0xc58] sm:$0xff]
        %v579 = vld [vmem:[%s156 + $0xc60] sm:$0xff]
        %v580 = vld [vmem:[%s156 + $0xc68] sm:$0xff]
        %v581 = vld [vmem:[%s156 + $0xc70] sm:$0xff]
        %v582 = vld [vmem:[%s156 + $0xc78] sm:$0xff]
        %v583 = vld [vmem:[%s156 + $0xc80] sm:$0xff]
        %v584 = vld [vmem:[%s156 + $0xc88] sm:$0xff]
        %v585 = vld [vmem:[%s156 + $0xc90] sm:$0xff]
        %v586 = vld [vmem:[%s156 + $0xc98] sm:$0xff]
        %v587 = vld [vmem:[%s156 + $0xca0] sm:$0xff]
        %v588 = vld [vmem:[%s156 + $0xca8] sm:$0xff]
        %v589 = vld [vmem:[%s156 + $0xcb0] sm:$0xff]
        %v590 = vld [vmem:[%s156 + $0xcb8] sm:$0xff]
        %v591 = vld [vmem:[%s156 + $0xcc0] sm:$0xff]
        %v592 = vld [vmem:[%s156 + $0xcc8] sm:$0xff]
        %v593 = vld [vmem:[%s156 + $0xcd0] sm:$0xff]
        %v594 = vld [vmem:[%s156 + $0xcd8] sm:$0xff]
        %v595 = vld [vmem:[%s156 + $0xce0] sm:$0xff]
        %v596 = vld [vmem:[%s156 + $0xce8] sm:$0xff]
        %v597 = vld [vmem:[%s156 + $0xcf0] sm:$0xff]
        %v598 = vld [vmem:[%s156 + $0xcf8] sm:$0xff]
        %v599 = vld [vmem:[%s156 + $0xd00] sm:$0xff]
        %v600 = vld [vmem:[%s156 + $0xd08] sm:$0xff]
        %v601 = vld [vmem:[%s156 + $0xd10] sm:$0xff]
        %v602 = vld [vmem:[%s156 + $0xd18] sm:$0xff]
        %v603 = vld [vmem:[%s156 + $0xd20] sm:$0xff]
        %v604 = vld [vmem:[%s156 + $0xd28] sm:$0xff]
        %v605 = vld [vmem:[%s156 + $0xd30] sm:$0xff]
        %v606 = vld [vmem:[%s156 + $0xd38] sm:$0xff]
        %v607 = vld [vmem:[%s156 + $0xd40] sm:$0xff]
        %v608 = vld [vmem:[%s156 + $0xd48] sm:$0xff]
        %v609 = vld [vmem:[%s156 + $0xd50] sm:$0xff]
        %v610 = vld [vmem:[%s156 + $0xd58] sm:$0xff]
        %v611 = vld [vmem:[%s156 + $0xd60] sm:$0xff]
        %v612 = vld [vmem:[%s156 + $0xd68] sm:$0xff]
        %v613 = vld [vmem:[%s156 + $0xd70] sm:$0xff]
        %v614 = vld [vmem:[%s156 + $0xd78] sm:$0xff]
        %v615 = vld [vmem:[%s156 + $0xd80] sm:$0xff]
        %v616 = vld [vmem:[%s156 + $0xd88] sm:$0xff]
        %v617 = vld [vmem:[%s156 + $0xd90] sm:$0xff]
        %v618 = vld [vmem:[%s156 + $0xd98] sm:$0xff]
        %v619 = vld [vmem:[%s156 + $0xda0] sm:$0xff]
        %v620 = vld [vmem:[%s156 + $0xda8] sm:$0xff]
        %v621 = vld [vmem:[%s156 + $0xdb0] sm:$0xff]
        %v622 = vld [vmem:[%s156 + $0xdb8] sm:$0xff]
        %v623 = vld [vmem:[%s156 + $0xdc0] sm:$0xff]
        %v624 = vld [vmem:[%s156 + $0xdc8] sm:$0xff]
        %v625 = vld [vmem:[%s156 + $0xdd0] sm:$0xff]
        %v626 = vld [vmem:[%s156 + $0xdd8] sm:$0xff]
        %v627 = vld [vmem:[%s156 + $0xde0] sm:$0xff]
        %v628 = vld [vmem:[%s156 + $0xde8] sm:$0xff]
        %v629 = vld [vmem:[%s156 + $0xdf0] sm:$0xff]
        %v630 = vld [vmem:[%s156 + $0xdf8] sm:$0xff]
        %v635 = vunpack.c.l.b16 %v179
        %v636 = vunpack.c.h.b16 %v179
        %v637 = vunpack.c.l.b16 %v180
        %v638 = vunpack.c.h.b16 %v180
        %v639 = vunpack.c.l.b16 %v181
        %v640 = vunpack.c.h.b16 %v181
        %v641 = vunpack.c.l.b16 %v182
        %v642 = vunpack.c.h.b16 %v182
        %v643 = vpack.c.b16 %v639, %v635
        %v644 = vpack.c.b16 %v640, %v636
        %v645 = vpack.c.b16 %v641, %v637
        %v646 = vpack.c.b16 %v642, %v638
        %v1099 = vunpack.c.l.b16 %v183
        %v1100 = vunpack.c.h.b16 %v183
        %v1101 = vunpack.c.l.b16 %v184
        %v1102 = vunpack.c.h.b16 %v184
        %v1103 = vunpack.c.l.b16 %v185
        %v1104 = vunpack.c.h.b16 %v185
        %v1105 = vunpack.c.l.b16 %v186
        %v1106 = vunpack.c.h.b16 %v186
        %v1107 = vunpack.c.l.b16 %v187
        %v1108 = vunpack.c.h.b16 %v187
        %v1109 = vunpack.c.l.b16 %v188
        %v1110 = vunpack.c.h.b16 %v188
        %v1111 = vunpack.c.l.b16 %v189
        %v1112 = vunpack.c.h.b16 %v189
        %v1113 = vunpack.c.l.b16 %v190
        %v1114 = vunpack.c.h.b16 %v190
        %v1115 = vunpack.c.l.b16 %v191
        %v1116 = vunpack.c.h.b16 %v191
        %v1117 = vunpack.c.l.b16 %v192
        %v1118 = vunpack.c.h.b16 %v192
        %v1119 = vunpack.c.l.b16 %v193
        %v1120 = vunpack.c.h.b16 %v193
        %v1121 = vunpack.c.l.b16 %v194
        %v1122 = vunpack.c.h.b16 %v194
        %v1123 = vunpack.c.l.b16 %v195
        %v1124 = vunpack.c.h.b16 %v195
        %v1125 = vunpack.c.l.b16 %v196
        %v1126 = vunpack.c.h.b16 %v196
        %v1127 = vunpack.c.l.b16 %v197
        %v1128 = vunpack.c.h.b16 %v197
        %v1129 = vunpack.c.l.b16 %v198
        %v1130 = vunpack.c.h.b16 %v198
        %v1131 = vunpack.c.l.b16 %v199
        %v1132 = vunpack.c.h.b16 %v199
        %v1133 = vunpack.c.l.b16 %v200
        %v1134 = vunpack.c.h.b16 %v200
        %v1135 = vunpack.c.l.b16 %v201
        %v1136 = vunpack.c.h.b16 %v201
        %v1137 = vunpack.c.l.b16 %v202
        %v1138 = vunpack.c.h.b16 %v202
        %v1139 = vunpack.c.l.b16 %v203
        %v1140 = vunpack.c.h.b16 %v203
        %v1141 = vunpack.c.l.b16 %v204
        %v1142 = vunpack.c.h.b16 %v204
        %v1143 = vunpack.c.l.b16 %v205
        %v1144 = vunpack.c.h.b16 %v205
        %v1145 = vunpack.c.l.b16 %v206
        %v1146 = vunpack.c.h.b16 %v206
        %v1147 = vunpack.c.l.b16 %v207
        %v1148 = vunpack.c.h.b16 %v207
        %v1149 = vunpack.c.l.b16 %v208
        %v1150 = vunpack.c.h.b16 %v208
        %v1151 = vunpack.c.l.b16 %v209
        %v1152 = vunpack.c.h.b16 %v209
        %v1153 = vunpack.c.l.b16 %v210
        %v1154 = vunpack.c.h.b16 %v210
        %v1155 = vunpack.c.l.b16 %v211
        %v1156 = vunpack.c.h.b16 %v211
        %v1157 = vunpack.c.l.b16 %v212
        %v1158 = vunpack.c.h.b16 %v212
        %v1159 = vunpack.c.l.b16 %v213
        %v1160 = vunpack.c.h.b16 %v213
        %v1161 = vunpack.c.l.b16 %v214
        %v1162 = vunpack.c.h.b16 %v214
        %v1163 = vunpack.c.l.b16 %v215
        %v1164 = vunpack.c.h.b16 %v215
        %v1165 = vunpack.c.l.b16 %v216
        %v1166 = vunpack.c.h.b16 %v216
        %v1167 = vunpack.c.l.b16 %v217
        %v1168 = vunpack.c.h.b16 %v217
        %v1169 = vunpack.c.l.b16 %v218
        %v1170 = vunpack.c.h.b16 %v218
        %v1171 = vunpack.c.l.b16 %v219
        %v1172 = vunpack.c.h.b16 %v219
        %v1173 = vunpack.c.l.b16 %v220
        %v1174 = vunpack.c.h.b16 %v220
        %v1175 = vunpack.c.l.b16 %v221
        %v1176 = vunpack.c.h.b16 %v221
        %v1177 = vunpack.c.l.b16 %v222
        %v1178 = vunpack.c.h.b16 %v222
        %v1179 = vunpack.c.l.b16 %v223
        %v1180 = vunpack.c.h.b16 %v223
        %v1181 = vunpack.c.l.b16 %v224
        %v1182 = vunpack.c.h.b16 %v224
        %v1183 = vunpack.c.l.b16 %v225
        %v1184 = vunpack.c.h.b16 %v225
        %v1185 = vunpack.c.l.b16 %v226
        %v1186 = vunpack.c.h.b16 %v226
        %v1187 = vunpack.c.l.b16 %v227
        %v1188 = vunpack.c.h.b16 %v227
        %v1189 = vunpack.c.l.b16 %v228
        %v1190 = vunpack.c.h.b16 %v228
        %v1191 = vunpack.c.l.b16 %v229
        %v1192 = vunpack.c.h.b16 %v229
        %v1193 = vunpack.c.l.b16 %v230
        %v1194 = vunpack.c.h.b16 %v230
        %v1195 = vunpack.c.l.b16 %v231
        %v1196 = vunpack.c.h.b16 %v231
        %v1197 = vunpack.c.l.b16 %v232
        %v1198 = vunpack.c.h.b16 %v232
        %v1199 = vunpack.c.l.b16 %v233
        %v1200 = vunpack.c.h.b16 %v233
        %v1201 = vunpack.c.l.b16 %v234
        %v1202 = vunpack.c.h.b16 %v234
        %v1203 = vunpack.c.l.b16 %v235
        %v1204 = vunpack.c.h.b16 %v235
        %v1205 = vunpack.c.l.b16 %v236
        %v1206 = vunpack.c.h.b16 %v236
        %v1207 = vunpack.c.l.b16 %v237
        %v1208 = vunpack.c.h.b16 %v237
        %v1209 = vunpack.c.l.b16 %v238
        %v1210 = vunpack.c.h.b16 %v238
        %v1211 = vunpack.c.l.b16 %v239
        %v1212 = vunpack.c.h.b16 %v239
        %v1213 = vunpack.c.l.b16 %v240
        %v1214 = vunpack.c.h.b16 %v240
        %v1215 = vunpack.c.l.b16 %v241
        %v1216 = vunpack.c.h.b16 %v241
        %v1217 = vunpack.c.l.b16 %v242
        %v1218 = vunpack.c.h.b16 %v242
        %v1219 = vunpack.c.l.b16 %v243
        %v1220 = vunpack.c.h.b16 %v243
        %v1221 = vunpack.c.l.b16 %v244
        %v1222 = vunpack.c.h.b16 %v244
        %v1223 = vunpack.c.l.b16 %v245
        %v1224 = vunpack.c.h.b16 %v245
        %v1225 = vunpack.c.l.b16 %v246
        %v1226 = vunpack.c.h.b16 %v246
        %v1227 = vunpack.c.l.b16 %v247
        %v1228 = vunpack.c.h.b16 %v247
        %v1229 = vunpack.c.l.b16 %v248
        %v1230 = vunpack.c.h.b16 %v248
        %v1231 = vunpack.c.l.b16 %v249
        %v1232 = vunpack.c.h.b16 %v249
        %v1233 = vunpack.c.l.b16 %v250
        %v1234 = vunpack.c.h.b16 %v250
        %v1235 = vunpack.c.l.b16 %v251
        %v1236 = vunpack.c.h.b16 %v251
        %v1237 = vunpack.c.l.b16 %v252
        %v1238 = vunpack.c.h.b16 %v252
        %v1239 = vunpack.c.l.b16 %v253
        %v1240 = vunpack.c.h.b16 %v253
        %v1241 = vunpack.c.l.b16 %v254
        %v1242 = vunpack.c.h.b16 %v254
        %v1243 = vunpack.c.l.b16 %v255
        %v1244 = vunpack.c.h.b16 %v255
        %v1245 = vunpack.c.l.b16 %v256
        %v1246 = vunpack.c.h.b16 %v256
        %v1247 = vunpack.c.l.b16 %v257
        %v1248 = vunpack.c.h.b16 %v257
        %v1249 = vunpack.c.l.b16 %v258
        %v1250 = vunpack.c.h.b16 %v258
        %v1251 = vunpack.c.l.b16 %v259
        %v1252 = vunpack.c.h.b16 %v259
        %v1253 = vunpack.c.l.b16 %v260
        %v1254 = vunpack.c.h.b16 %v260
        %v1255 = vunpack.c.l.b16 %v261
        %v1256 = vunpack.c.h.b16 %v261
        %v1257 = vunpack.c.l.b16 %v262
        %v1258 = vunpack.c.h.b16 %v262
        %v1259 = vunpack.c.l.b16 %v263
        %v1260 = vunpack.c.h.b16 %v263
        %v1261 = vunpack.c.l.b16 %v264
        %v1262 = vunpack.c.h.b16 %v264
        %v1263 = vunpack.c.l.b16 %v265
        %v1264 = vunpack.c.h.b16 %v265
        %v1265 = vunpack.c.l.b16 %v266
        %v1266 = vunpack.c.h.b16 %v266
        %v1267 = vunpack.c.l.b16 %v267
        %v1268 = vunpack.c.h.b16 %v267
        %v1269 = vunpack.c.l.b16 %v268
        %v1270 = vunpack.c.h.b16 %v268
        %v1271 = vunpack.c.l.b16 %v269
        %v1272 = vunpack.c.h.b16 %v269
        %v1273 = vunpack.c.l.b16 %v270
        %v1274 = vunpack.c.h.b16 %v270
        %v1275 = vunpack.c.l.b16 %v271
        %v1276 = vunpack.c.h.b16 %v271
        %v1277 = vunpack.c.l.b16 %v272
        %v1278 = vunpack.c.h.b16 %v272
        %v1279 = vunpack.c.l.b16 %v273
        %v1280 = vunpack.c.h.b16 %v273
        %v1281 = vunpack.c.l.b16 %v274
        %v1282 = vunpack.c.h.b16 %v274
        %v1283 = vunpack.c.l.b16 %v275
        %v1284 = vunpack.c.h.b16 %v275
        %v1285 = vunpack.c.l.b16 %v276
        %v1286 = vunpack.c.h.b16 %v276
        %v1287 = vunpack.c.l.b16 %v277
        %v1288 = vunpack.c.h.b16 %v277
        %v1289 = vunpack.c.l.b16 %v278
        %v1290 = vunpack.c.h.b16 %v278
        %v1291 = vunpack.c.l.b16 %v279
        %v1292 = vunpack.c.h.b16 %v279
        %v1293 = vunpack.c.l.b16 %v280
        %v1294 = vunpack.c.h.b16 %v280
        %v1295 = vunpack.c.l.b16 %v281
        %v1296 = vunpack.c.h.b16 %v281
        %v1297 = vunpack.c.l.b16 %v282
        %v1298 = vunpack.c.h.b16 %v282
        %v1299 = vunpack.c.l.b16 %v283
        %v1300 = vunpack.c.h.b16 %v283
        %v1301 = vunpack.c.l.b16 %v284
        %v1302 = vunpack.c.h.b16 %v284
        %v1303 = vunpack.c.l.b16 %v285
        %v1304 = vunpack.c.h.b16 %v285
        %v1305 = vunpack.c.l.b16 %v286
        %v1306 = vunpack.c.h.b16 %v286
        %v1307 = vunpack.c.l.b16 %v287
        %v1308 = vunpack.c.h.b16 %v287
        %v1309 = vunpack.c.l.b16 %v288
        %v1310 = vunpack.c.h.b16 %v288
        %v1311 = vunpack.c.l.b16 %v289
        %v1312 = vunpack.c.h.b16 %v289
        %v1313 = vunpack.c.l.b16 %v290
        %v1314 = vunpack.c.h.b16 %v290
        %v1315 = vunpack.c.l.b16 %v291
        %v1316 = vunpack.c.h.b16 %v291
        %v1317 = vunpack.c.l.b16 %v292
        %v1318 = vunpack.c.h.b16 %v292
        %v1319 = vunpack.c.l.b16 %v293
        %v1320 = vunpack.c.h.b16 %v293
        %v1321 = vunpack.c.l.b16 %v294
        %v1322 = vunpack.c.h.b16 %v294
        %v1323 = vunpack.c.l.b16 %v295
        %v1324 = vunpack.c.h.b16 %v295
        %v1325 = vunpack.c.l.b16 %v296
        %v1326 = vunpack.c.h.b16 %v296
        %v1327 = vunpack.c.l.b16 %v297
        %v1328 = vunpack.c.h.b16 %v297
        %v1329 = vunpack.c.l.b16 %v298
        %v1330 = vunpack.c.h.b16 %v298
        %v1331 = vunpack.c.l.b16 %v299
        %v1332 = vunpack.c.h.b16 %v299
        %v1333 = vunpack.c.l.b16 %v300
        %v1334 = vunpack.c.h.b16 %v300
        %v1335 = vunpack.c.l.b16 %v301
        %v1336 = vunpack.c.h.b16 %v301
        %v1337 = vunpack.c.l.b16 %v302
        %v1338 = vunpack.c.h.b16 %v302
        %v1339 = vunpack.c.l.b16 %v303
        %v1340 = vunpack.c.h.b16 %v303
        %v1341 = vunpack.c.l.b16 %v304
        %v1342 = vunpack.c.h.b16 %v304
        %v1343 = vunpack.c.l.b16 %v305
        %v1344 = vunpack.c.h.b16 %v305
        %v1345 = vunpack.c.l.b16 %v306
        %v1346 = vunpack.c.h.b16 %v306
        %v1347 = vunpack.c.l.b16 %v307
        %v1348 = vunpack.c.h.b16 %v307
        %v1349 = vunpack.c.l.b16 %v308
        %v1350 = vunpack.c.h.b16 %v308
        %v1351 = vunpack.c.l.b16 %v309
        %v1352 = vunpack.c.h.b16 %v309
        %v1353 = vunpack.c.l.b16 %v310
        %v1354 = vunpack.c.h.b16 %v310
        %v1355 = vunpack.c.l.b16 %v311
        %v1356 = vunpack.c.h.b16 %v311
        %v1357 = vunpack.c.l.b16 %v312
        %v1358 = vunpack.c.h.b16 %v312
        %v1359 = vunpack.c.l.b16 %v313
        %v1360 = vunpack.c.h.b16 %v313
        %v1361 = vunpack.c.l.b16 %v314
        %v1362 = vunpack.c.h.b16 %v314
        %v1363 = vunpack.c.l.b16 %v315
        %v1364 = vunpack.c.h.b16 %v315
        %v1365 = vunpack.c.l.b16 %v316
        %v1366 = vunpack.c.h.b16 %v316
        %v1367 = vunpack.c.l.b16 %v317
        %v1368 = vunpack.c.h.b16 %v317
        %v1369 = vunpack.c.l.b16 %v318
        %v1370 = vunpack.c.h.b16 %v318
        %v1371 = vunpack.c.l.b16 %v319
        %v1372 = vunpack.c.h.b16 %v319
        %v1373 = vunpack.c.l.b16 %v320
        %v1374 = vunpack.c.h.b16 %v320
        %v1375 = vunpack.c.l.b16 %v321
        %v1376 = vunpack.c.h.b16 %v321
        %v1377 = vunpack.c.l.b16 %v322
        %v1378 = vunpack.c.h.b16 %v322
        %v1379 = vunpack.c.l.b16 %v323
        %v1380 = vunpack.c.h.b16 %v323
        %v1381 = vunpack.c.l.b16 %v324
        %v1382 = vunpack.c.h.b16 %v324
        %v1383 = vunpack.c.l.b16 %v325
        %v1384 = vunpack.c.h.b16 %v325
        %v1385 = vunpack.c.l.b16 %v326
        %v1386 = vunpack.c.h.b16 %v326
        %v1387 = vunpack.c.l.b16 %v327
        %v1388 = vunpack.c.h.b16 %v327
        %v1389 = vunpack.c.l.b16 %v328
        %v1390 = vunpack.c.h.b16 %v328
        %v1391 = vunpack.c.l.b16 %v329
        %v1392 = vunpack.c.h.b16 %v329
        %v1393 = vunpack.c.l.b16 %v330
        %v1394 = vunpack.c.h.b16 %v330
        %v1395 = vunpack.c.l.b16 %v331
        %v1396 = vunpack.c.h.b16 %v331
        %v1397 = vunpack.c.l.b16 %v332
        %v1398 = vunpack.c.h.b16 %v332
        %v1399 = vunpack.c.l.b16 %v333
        %v1400 = vunpack.c.h.b16 %v333
        %v1401 = vunpack.c.l.b16 %v334
        %v1402 = vunpack.c.h.b16 %v334
        %v1403 = vunpack.c.l.b16 %v335
        %v1404 = vunpack.c.h.b16 %v335
        %v1405 = vunpack.c.l.b16 %v336
        %v1406 = vunpack.c.h.b16 %v336
        %v1407 = vunpack.c.l.b16 %v337
        %v1408 = vunpack.c.h.b16 %v337
        %v1409 = vunpack.c.l.b16 %v338
        %v1410 = vunpack.c.h.b16 %v338
        %v1411 = vunpack.c.l.b16 %v339
        %v1412 = vunpack.c.h.b16 %v339
        %v1413 = vunpack.c.l.b16 %v340
        %v1414 = vunpack.c.h.b16 %v340
        %v1415 = vunpack.c.l.b16 %v341
        %v1416 = vunpack.c.h.b16 %v341
        %v1417 = vunpack.c.l.b16 %v342
        %v1418 = vunpack.c.h.b16 %v342
        %v1419 = vunpack.c.l.b16 %v343
        %v1420 = vunpack.c.h.b16 %v343
        %v1421 = vunpack.c.l.b16 %v344
        %v1422 = vunpack.c.h.b16 %v344
        %v1423 = vunpack.c.l.b16 %v345
        %v1424 = vunpack.c.h.b16 %v345
        %v1425 = vunpack.c.l.b16 %v346
        %v1426 = vunpack.c.h.b16 %v346
        %v1427 = vunpack.c.l.b16 %v347
        %v1428 = vunpack.c.h.b16 %v347
        %v1429 = vunpack.c.l.b16 %v348
        %v1430 = vunpack.c.h.b16 %v348
        %v1431 = vunpack.c.l.b16 %v349
        %v1432 = vunpack.c.h.b16 %v349
        %v1433 = vunpack.c.l.b16 %v350
        %v1434 = vunpack.c.h.b16 %v350
        %v1435 = vunpack.c.l.b16 %v351
        %v1436 = vunpack.c.h.b16 %v351
        %v1437 = vunpack.c.l.b16 %v352
        %v1438 = vunpack.c.h.b16 %v352
        %v1439 = vunpack.c.l.b16 %v353
        %v1440 = vunpack.c.h.b16 %v353
        %v1441 = vunpack.c.l.b16 %v354
        %v1442 = vunpack.c.h.b16 %v354
        %v1443 = vunpack.c.l.b16 %v355
        %v1444 = vunpack.c.h.b16 %v355
        %v1445 = vunpack.c.l.b16 %v356
        %v1446 = vunpack.c.h.b16 %v356
        %v1447 = vunpack.c.l.b16 %v357
        %v1448 = vunpack.c.h.b16 %v357
        %v1449 = vunpack.c.l.b16 %v358
        %v1450 = vunpack.c.h.b16 %v358
        %v1451 = vunpack.c.l.b16 %v359
        %v1452 = vunpack.c.h.b16 %v359
        %v1453 = vunpack.c.l.b16 %v360
        %v1454 = vunpack.c.h.b16 %v360
        %v1455 = vunpack.c.l.b16 %v361
        %v1456 = vunpack.c.h.b16 %v361
        %v1457 = vunpack.c.l.b16 %v362
        %v1458 = vunpack.c.h.b16 %v362
        %v1459 = vunpack.c.l.b16 %v363
        %v1460 = vunpack.c.h.b16 %v363
        %v1461 = vunpack.c.l.b16 %v364
        %v1462 = vunpack.c.h.b16 %v364
        %v1463 = vunpack.c.l.b16 %v365
        %v1464 = vunpack.c.h.b16 %v365
        %v1465 = vunpack.c.l.b16 %v366
        %v1466 = vunpack.c.h.b16 %v366
        %v1467 = vunpack.c.l.b16 %v367
        %v1468 = vunpack.c.h.b16 %v367
        %v1469 = vunpack.c.l.b16 %v368
        %v1470 = vunpack.c.h.b16 %v368
        %v1471 = vunpack.c.l.b16 %v369
        %v1472 = vunpack.c.h.b16 %v369
        %v1473 = vunpack.c.l.b16 %v370
        %v1474 = vunpack.c.h.b16 %v370
        %v1475 = vunpack.c.l.b16 %v371
        %v1476 = vunpack.c.h.b16 %v371
        %v1477 = vunpack.c.l.b16 %v372
        %v1478 = vunpack.c.h.b16 %v372
        %v1479 = vunpack.c.l.b16 %v373
        %v1480 = vunpack.c.h.b16 %v373
        %v1481 = vunpack.c.l.b16 %v374
        %v1482 = vunpack.c.h.b16 %v374
        %v1483 = vunpack.c.l.b16 %v375
        %v1484 = vunpack.c.h.b16 %v375
        %v1485 = vunpack.c.l.b16 %v376
        %v1486 = vunpack.c.h.b16 %v376
        %v1487 = vunpack.c.l.b16 %v377
        %v1488 = vunpack.c.h.b16 %v377
        %v1489 = vunpack.c.l.b16 %v378
        %v1490 = vunpack.c.h.b16 %v378
        %v1491 = vunpack.c.l.b16 %v379
        %v1492 = vunpack.c.h.b16 %v379
        %v1493 = vunpack.c.l.b16 %v380
        %v1494 = vunpack.c.h.b16 %v380
        %v1495 = vunpack.c.l.b16 %v381
        %v1496 = vunpack.c.h.b16 %v381
        %v1497 = vunpack.c.l.b16 %v382
        %v1498 = vunpack.c.h.b16 %v382
        %v1499 = vunpack.c.l.b16 %v383
        %v1500 = vunpack.c.h.b16 %v383
        %v1501 = vunpack.c.l.b16 %v384
        %v1502 = vunpack.c.h.b16 %v384
        %v1503 = vunpack.c.l.b16 %v385
        %v1504 = vunpack.c.h.b16 %v385
        %v1505 = vunpack.c.l.b16 %v386
        %v1506 = vunpack.c.h.b16 %v386
        %v1507 = vunpack.c.l.b16 %v387
        %v1508 = vunpack.c.h.b16 %v387
        %v1509 = vunpack.c.l.b16 %v388
        %v1510 = vunpack.c.h.b16 %v388
        %v1511 = vunpack.c.l.b16 %v389
        %v1512 = vunpack.c.h.b16 %v389
        %v1513 = vunpack.c.l.b16 %v390
        %v1514 = vunpack.c.h.b16 %v390
        %v1515 = vunpack.c.l.b16 %v391
        %v1516 = vunpack.c.h.b16 %v391
        %v1517 = vunpack.c.l.b16 %v392
        %v1518 = vunpack.c.h.b16 %v392
        %v1519 = vunpack.c.l.b16 %v393
        %v1520 = vunpack.c.h.b16 %v393
        %v1521 = vunpack.c.l.b16 %v394
        %v1522 = vunpack.c.h.b16 %v394
        %v1523 = vunpack.c.l.b16 %v395
        %v1524 = vunpack.c.h.b16 %v395
        %v1525 = vunpack.c.l.b16 %v396
        %v1526 = vunpack.c.h.b16 %v396
        %v1527 = vunpack.c.l.b16 %v397
        %v1528 = vunpack.c.h.b16 %v397
        %v1529 = vunpack.c.l.b16 %v398
        %v1530 = vunpack.c.h.b16 %v398
        %v1531 = vunpack.c.l.b16 %v399
        %v1532 = vunpack.c.h.b16 %v399
        %v1533 = vunpack.c.l.b16 %v400
        %v1534 = vunpack.c.h.b16 %v400
        %v1535 = vunpack.c.l.b16 %v401
        %v1536 = vunpack.c.h.b16 %v401
        %v1537 = vunpack.c.l.b16 %v402
        %v1538 = vunpack.c.h.b16 %v402
        %v1539 = vunpack.c.l.b16 %v403
        %v1540 = vunpack.c.h.b16 %v403
        %v1541 = vunpack.c.l.b16 %v404
        %v1542 = vunpack.c.h.b16 %v404
        %v1543 = vunpack.c.l.b16 %v405
        %v1544 = vunpack.c.h.b16 %v405
        %v1545 = vunpack.c.l.b16 %v406
        %v1546 = vunpack.c.h.b16 %v406
        %v1547 = vunpack.c.l.b16 %v407
        %v1548 = vunpack.c.h.b16 %v407
        %v1549 = vunpack.c.l.b16 %v408
        %v1550 = vunpack.c.h.b16 %v408
        %v1551 = vunpack.c.l.b16 %v409
        %v1552 = vunpack.c.h.b16 %v409
        %v1553 = vunpack.c.l.b16 %v410
        %v1554 = vunpack.c.h.b16 %v410
        %v1555 = vunpack.c.l.b16 %v411
        %v1556 = vunpack.c.h.b16 %v411
        %v1557 = vunpack.c.l.b16 %v412
        %v1558 = vunpack.c.h.b16 %v412
        %v1559 = vunpack.c.l.b16 %v413
        %v1560 = vunpack.c.h.b16 %v413
        %v1561 = vunpack.c.l.b16 %v414
        %v1562 = vunpack.c.h.b16 %v414
        %v1563 = vunpack.c.l.b16 %v415
        %v1564 = vunpack.c.h.b16 %v415
        %v1565 = vunpack.c.l.b16 %v416
        %v1566 = vunpack.c.h.b16 %v416
        %v1567 = vunpack.c.l.b16 %v417
        %v1568 = vunpack.c.h.b16 %v417
        %v1569 = vunpack.c.l.b16 %v418
        %v1570 = vunpack.c.h.b16 %v418
        %v1571 = vunpack.c.l.b16 %v419
        %v1572 = vunpack.c.h.b16 %v419
        %v1573 = vunpack.c.l.b16 %v420
        %v1574 = vunpack.c.h.b16 %v420
        %v1575 = vunpack.c.l.b16 %v421
        %v1576 = vunpack.c.h.b16 %v421
        %v1577 = vunpack.c.l.b16 %v422
        %v1578 = vunpack.c.h.b16 %v422
        %v1579 = vunpack.c.l.b16 %v423
        %v1580 = vunpack.c.h.b16 %v423
        %v1581 = vunpack.c.l.b16 %v424
        %v1582 = vunpack.c.h.b16 %v424
        %v1583 = vunpack.c.l.b16 %v425
        %v1584 = vunpack.c.h.b16 %v425
        %v1585 = vunpack.c.l.b16 %v426
        %v1586 = vunpack.c.h.b16 %v426
        %v1587 = vunpack.c.l.b16 %v427
        %v1588 = vunpack.c.h.b16 %v427
        %v1589 = vunpack.c.l.b16 %v428
        %v1590 = vunpack.c.h.b16 %v428
        %v1591 = vunpack.c.l.b16 %v429
        %v1592 = vunpack.c.h.b16 %v429
        %v1593 = vunpack.c.l.b16 %v430
        %v1594 = vunpack.c.h.b16 %v430
        %v1595 = vunpack.c.l.b16 %v431
        %v1596 = vunpack.c.h.b16 %v431
        %v1597 = vunpack.c.l.b16 %v432
        %v1598 = vunpack.c.h.b16 %v432
        %v1599 = vunpack.c.l.b16 %v433
        %v1600 = vunpack.c.h.b16 %v433
        %v1601 = vunpack.c.l.b16 %v434
        %v1602 = vunpack.c.h.b16 %v434
        %v1603 = vunpack.c.l.b16 %v435
        %v1604 = vunpack.c.h.b16 %v435
        %v1605 = vunpack.c.l.b16 %v436
        %v1606 = vunpack.c.h.b16 %v436
        %v1607 = vunpack.c.l.b16 %v437
        %v1608 = vunpack.c.h.b16 %v437
        %v1609 = vunpack.c.l.b16 %v438
        %v1610 = vunpack.c.h.b16 %v438
        %v1611 = vunpack.c.l.b16 %v439
        %v1612 = vunpack.c.h.b16 %v439
        %v1613 = vunpack.c.l.b16 %v440
        %v1614 = vunpack.c.h.b16 %v440
        %v1615 = vunpack.c.l.b16 %v441
        %v1616 = vunpack.c.h.b16 %v441
        %v1617 = vunpack.c.l.b16 %v442
        %v1618 = vunpack.c.h.b16 %v442
        %v1619 = vunpack.c.l.b16 %v443
        %v1620 = vunpack.c.h.b16 %v443
        %v1621 = vunpack.c.l.b16 %v444
        %v1622 = vunpack.c.h.b16 %v444
        %v1623 = vunpack.c.l.b16 %v445
        %v1624 = vunpack.c.h.b16 %v445
        %v1625 = vunpack.c.l.b16 %v446
        %v1626 = vunpack.c.h.b16 %v446
        %v1627 = vunpack.c.l.b16 %v447
        %v1628 = vunpack.c.h.b16 %v447
        %v1629 = vunpack.c.l.b16 %v448
        %v1630 = vunpack.c.h.b16 %v448
        %v1631 = vunpack.c.l.b16 %v449
        %v1632 = vunpack.c.h.b16 %v449
        %v1633 = vunpack.c.l.b16 %v450
        %v1634 = vunpack.c.h.b16 %v450
        %v1635 = vunpack.c.l.b16 %v451
        %v1636 = vunpack.c.h.b16 %v451
        %v1637 = vunpack.c.l.b16 %v452
        %v1638 = vunpack.c.h.b16 %v452
        %v1639 = vunpack.c.l.b16 %v453
        %v1640 = vunpack.c.h.b16 %v453
        %v1641 = vunpack.c.l.b16 %v454
        %v1642 = vunpack.c.h.b16 %v454
        %v1643 = vunpack.c.l.b16 %v455
        %v1644 = vunpack.c.h.b16 %v455
        %v1645 = vunpack.c.l.b16 %v456
        %v1646 = vunpack.c.h.b16 %v456
        %v1647 = vunpack.c.l.b16 %v457
        %v1648 = vunpack.c.h.b16 %v457
        %v1649 = vunpack.c.l.b16 %v458
        %v1650 = vunpack.c.h.b16 %v458
        %v1651 = vunpack.c.l.b16 %v459
        %v1652 = vunpack.c.h.b16 %v459
        %v1653 = vunpack.c.l.b16 %v460
        %v1654 = vunpack.c.h.b16 %v460
        %v1655 = vunpack.c.l.b16 %v461
        %v1656 = vunpack.c.h.b16 %v461
        %v1657 = vunpack.c.l.b16 %v462
        %v1658 = vunpack.c.h.b16 %v462
        %v1659 = vunpack.c.l.b16 %v463
        %v1660 = vunpack.c.h.b16 %v463
        %v1661 = vunpack.c.l.b16 %v464
        %v1662 = vunpack.c.h.b16 %v464
        %v1663 = vunpack.c.l.b16 %v465
        %v1664 = vunpack.c.h.b16 %v465
        %v1665 = vunpack.c.l.b16 %v466
        %v1666 = vunpack.c.h.b16 %v466
        %v1667 = vunpack.c.l.b16 %v467
        %v1668 = vunpack.c.h.b16 %v467
        %v1669 = vunpack.c.l.b16 %v468
        %v1670 = vunpack.c.h.b16 %v468
        %v1671 = vunpack.c.l.b16 %v469
        %v1672 = vunpack.c.h.b16 %v469
        %v1673 = vunpack.c.l.b16 %v470
        %v1674 = vunpack.c.h.b16 %v470
        %v1675 = vunpack.c.l.b16 %v471
        %v1676 = vunpack.c.h.b16 %v471
        %v1677 = vunpack.c.l.b16 %v472
        %v1678 = vunpack.c.h.b16 %v472
        %v1679 = vunpack.c.l.b16 %v473
        %v1680 = vunpack.c.h.b16 %v473
        %v1681 = vunpack.c.l.b16 %v474
        %v1682 = vunpack.c.h.b16 %v474
        %v1683 = vunpack.c.l.b16 %v475
        %v1684 = vunpack.c.h.b16 %v475
        %v1685 = vunpack.c.l.b16 %v476
        %v1686 = vunpack.c.h.b16 %v476
        %v1687 = vunpack.c.l.b16 %v477
        %v1688 = vunpack.c.h.b16 %v477
        %v1689 = vunpack.c.l.b16 %v478
        %v1690 = vunpack.c.h.b16 %v478
        %v1691 = vunpack.c.l.b16 %v479
        %v1692 = vunpack.c.h.b16 %v479
        %v1693 = vunpack.c.l.b16 %v480
        %v1694 = vunpack.c.h.b16 %v480
        %v1695 = vunpack.c.l.b16 %v481
        %v1696 = vunpack.c.h.b16 %v481
        %v1697 = vunpack.c.l.b16 %v482
        %v1698 = vunpack.c.h.b16 %v482
        %v1699 = vunpack.c.l.b16 %v483
        %v1700 = vunpack.c.h.b16 %v483
        %v1701 = vunpack.c.l.b16 %v484
        %v1702 = vunpack.c.h.b16 %v484
        %v1703 = vunpack.c.l.b16 %v485
        %v1704 = vunpack.c.h.b16 %v485
        %v1705 = vunpack.c.l.b16 %v486
        %v1706 = vunpack.c.h.b16 %v486
        %v1707 = vunpack.c.l.b16 %v487
        %v1708 = vunpack.c.h.b16 %v487
        %v1709 = vunpack.c.l.b16 %v488
        %v1710 = vunpack.c.h.b16 %v488
        %v1711 = vunpack.c.l.b16 %v489
        %v1712 = vunpack.c.h.b16 %v489
        %v1713 = vunpack.c.l.b16 %v490
        %v1714 = vunpack.c.h.b16 %v490
        %v1715 = vunpack.c.l.b16 %v491
        %v1716 = vunpack.c.h.b16 %v491
        %v1717 = vunpack.c.l.b16 %v492
        %v1718 = vunpack.c.h.b16 %v492
        %v1719 = vunpack.c.l.b16 %v493
        %v1720 = vunpack.c.h.b16 %v493
        %v1721 = vunpack.c.l.b16 %v494
        %v1722 = vunpack.c.h.b16 %v494
        %v1723 = vunpack.c.l.b16 %v495
        %v1724 = vunpack.c.h.b16 %v495
        %v1725 = vunpack.c.l.b16 %v496
        %v1726 = vunpack.c.h.b16 %v496
        %v1727 = vunpack.c.l.b16 %v497
        %v1728 = vunpack.c.h.b16 %v497
        %v1729 = vunpack.c.l.b16 %v498
        %v1730 = vunpack.c.h.b16 %v498
        %v1731 = vunpack.c.l.b16 %v499
        %v1732 = vunpack.c.h.b16 %v499
        %v1733 = vunpack.c.l.b16 %v500
        %v1734 = vunpack.c.h.b16 %v500
        %v1735 = vunpack.c.l.b16 %v501
        %v1736 = vunpack.c.h.b16 %v501
        %v1737 = vunpack.c.l.b16 %v502
        %v1738 = vunpack.c.h.b16 %v502
        %v1739 = vunpack.c.l.b16 %v503
        %v1740 = vunpack.c.h.b16 %v503
        %v1741 = vunpack.c.l.b16 %v504
        %v1742 = vunpack.c.h.b16 %v504
        %v1743 = vunpack.c.l.b16 %v505
        %v1744 = vunpack.c.h.b16 %v505
        %v1745 = vunpack.c.l.b16 %v506
        %v1746 = vunpack.c.h.b16 %v506
        %v1747 = vunpack.c.l.b16 %v507
        %v1748 = vunpack.c.h.b16 %v507
        %v1749 = vunpack.c.l.b16 %v508
        %v1750 = vunpack.c.h.b16 %v508
        %v1751 = vunpack.c.l.b16 %v509
        %v1752 = vunpack.c.h.b16 %v509
        %v1753 = vunpack.c.l.b16 %v510
        %v1754 = vunpack.c.h.b16 %v510
        %v1755 = vunpack.c.l.b16 %v511
        %v1756 = vunpack.c.h.b16 %v511
        %v1757 = vunpack.c.l.b16 %v512
        %v1758 = vunpack.c.h.b16 %v512
        %v1759 = vunpack.c.l.b16 %v513
        %v1760 = vunpack.c.h.b16 %v513
        %v1761 = vunpack.c.l.b16 %v514
        %v1762 = vunpack.c.h.b16 %v514
        %v1763 = vunpack.c.l.b16 %v515
        %v1764 = vunpack.c.h.b16 %v515
        %v1765 = vunpack.c.l.b16 %v516
        %v1766 = vunpack.c.h.b16 %v516
        %v1767 = vunpack.c.l.b16 %v517
        %v1768 = vunpack.c.h.b16 %v517
        %v1769 = vunpack.c.l.b16 %v518
        %v1770 = vunpack.c.h.b16 %v518
        %v1771 = vunpack.c.l.b16 %v519
        %v1772 = vunpack.c.h.b16 %v519
        %v1773 = vunpack.c.l.b16 %v520
        %v1774 = vunpack.c.h.b16 %v520
        %v1775 = vunpack.c.l.b16 %v521
        %v1776 = vunpack.c.h.b16 %v521
        %v1777 = vunpack.c.l.b16 %v522
        %v1778 = vunpack.c.h.b16 %v522
        %v1779 = vunpack.c.l.b16 %v523
        %v1780 = vunpack.c.h.b16 %v523
        %v1781 = vunpack.c.l.b16 %v524
        %v1782 = vunpack.c.h.b16 %v524
        %v1783 = vunpack.c.l.b16 %v525
        %v1784 = vunpack.c.h.b16 %v525
        %v1785 = vunpack.c.l.b16 %v526
        %v1786 = vunpack.c.h.b16 %v526
        %v1787 = vunpack.c.l.b16 %v527
        %v1788 = vunpack.c.h.b16 %v527
        %v1789 = vunpack.c.l.b16 %v528
        %v1790 = vunpack.c.h.b16 %v528
        %v1791 = vunpack.c.l.b16 %v529
        %v1792 = vunpack.c.h.b16 %v529
        %v1793 = vunpack.c.l.b16 %v530
        %v1794 = vunpack.c.h.b16 %v530
        %v1795 = vunpack.c.l.b16 %v531
        %v1796 = vunpack.c.h.b16 %v531
        %v1797 = vunpack.c.l.b16 %v532
        %v1798 = vunpack.c.h.b16 %v532
        %v1799 = vunpack.c.l.b16 %v533
        %v1800 = vunpack.c.h.b16 %v533
        %v1801 = vunpack.c.l.b16 %v534
        %v1802 = vunpack.c.h.b16 %v534
        %v1803 = vunpack.c.l.b16 %v535
        %v1804 = vunpack.c.h.b16 %v535
        %v1805 = vunpack.c.l.b16 %v536
        %v1806 = vunpack.c.h.b16 %v536
        %v1807 = vunpack.c.l.b16 %v537
        %v1808 = vunpack.c.h.b16 %v537
        %v1809 = vunpack.c.l.b16 %v538
        %v1810 = vunpack.c.h.b16 %v538
        %v1811 = vunpack.c.l.b16 %v539
        %v1812 = vunpack.c.h.b16 %v539
        %v1813 = vunpack.c.l.b16 %v540
        %v1814 = vunpack.c.h.b16 %v540
        %v1815 = vunpack.c.l.b16 %v541
        %v1816 = vunpack.c.h.b16 %v541
        %v1817 = vunpack.c.l.b16 %v542
        %v1818 = vunpack.c.h.b16 %v542
        %v1819 = vunpack.c.l.b16 %v543
        %v1820 = vunpack.c.h.b16 %v543
        %v1821 = vunpack.c.l.b16 %v544
        %v1822 = vunpack.c.h.b16 %v544
        %v1823 = vunpack.c.l.b16 %v545
        %v1824 = vunpack.c.h.b16 %v545
        %v1825 = vunpack.c.l.b16 %v546
        %v1826 = vunpack.c.h.b16 %v546
        %v1827 = vunpack.c.l.b16 %v547
        %v1828 = vunpack.c.h.b16 %v547
        %v1829 = vunpack.c.l.b16 %v548
        %v1830 = vunpack.c.h.b16 %v548
        %v1831 = vunpack.c.l.b16 %v549
        %v1832 = vunpack.c.h.b16 %v549
        %v1833 = vunpack.c.l.b16 %v550
        %v1834 = vunpack.c.h.b16 %v550
        %v1835 = vunpack.c.l.b16 %v551
        %v1836 = vunpack.c.h.b16 %v551
        %v1837 = vunpack.c.l.b16 %v552
        %v1838 = vunpack.c.h.b16 %v552
        %v1839 = vunpack.c.l.b16 %v553
        %v1840 = vunpack.c.h.b16 %v553
        %v1841 = vunpack.c.l.b16 %v554
        %v1842 = vunpack.c.h.b16 %v554
        %v1843 = vunpack.c.l.b16 %v555
        %v1844 = vunpack.c.h.b16 %v555
        %v1845 = vunpack.c.l.b16 %v556
        %v1846 = vunpack.c.h.b16 %v556
        %v1847 = vunpack.c.l.b16 %v557
        %v1848 = vunpack.c.h.b16 %v557
        %v1849 = vunpack.c.l.b16 %v558
        %v1850 = vunpack.c.h.b16 %v558
        %v1851 = vunpack.c.l.b16 %v559
        %v1852 = vunpack.c.h.b16 %v559
        %v1853 = vunpack.c.l.b16 %v560
        %v1854 = vunpack.c.h.b16 %v560
        %v1855 = vunpack.c.l.b16 %v561
        %v1856 = vunpack.c.h.b16 %v561
        %v1857 = vunpack.c.l.b16 %v562
        %v1858 = vunpack.c.h.b16 %v562
        %v1859 = vunpack.c.l.b16 %v563
        %v1860 = vunpack.c.h.b16 %v563
        %v1861 = vunpack.c.l.b16 %v564
        %v1862 = vunpack.c.h.b16 %v564
        %v1863 = vunpack.c.l.b16 %v565
        %v1864 = vunpack.c.h.b16 %v565
        %v1865 = vunpack.c.l.b16 %v566
        %v1866 = vunpack.c.h.b16 %v566
        %v1867 = vunpack.c.l.b16 %v567
        %v1868 = vunpack.c.h.b16 %v567
        %v1869 = vunpack.c.l.b16 %v568
        %v1870 = vunpack.c.h.b16 %v568
        %v1871 = vunpack.c.l.b16 %v569
        %v1872 = vunpack.c.h.b16 %v569
        %v1873 = vunpack.c.l.b16 %v570
        %v1874 = vunpack.c.h.b16 %v570
        %v1875 = vunpack.c.l.b16 %v571
        %v1876 = vunpack.c.h.b16 %v571
        %v1877 = vunpack.c.l.b16 %v572
        %v1878 = vunpack.c.h.b16 %v572
        %v1879 = vunpack.c.l.b16 %v573
        %v1880 = vunpack.c.h.b16 %v573
        %v1881 = vunpack.c.l.b16 %v574
        %v1882 = vunpack.c.h.b16 %v574
        %v1883 = vunpack.c.l.b16 %v575
        %v1884 = vunpack.c.h.b16 %v575
        %v1885 = vunpack.c.l.b16 %v576
        %v1886 = vunpack.c.h.b16 %v576
        %v1887 = vunpack.c.l.b16 %v577
        %v1888 = vunpack.c.h.b16 %v577
        %v1889 = vunpack.c.l.b16 %v578
        %v1890 = vunpack.c.h.b16 %v578
        %v1891 = vunpack.c.l.b16 %v579
        %v1892 = vunpack.c.h.b16 %v579
        %v1893 = vunpack.c.l.b16 %v580
        %v1894 = vunpack.c.h.b16 %v580
        %v1895 = vunpack.c.l.b16 %v581
        %v1896 = vunpack.c.h.b16 %v581
        %v1897 = vunpack.c.l.b16 %v582
        %v1898 = vunpack.c.h.b16 %v582
        %v1899 = vunpack.c.l.b16 %v583
        %v1900 = vunpack.c.h.b16 %v583
        %v1901 = vunpack.c.l.b16 %v584
        %v1902 = vunpack.c.h.b16 %v584
        %v1903 = vunpack.c.l.b16 %v585
        %v1904 = vunpack.c.h.b16 %v585
        %v1905 = vunpack.c.l.b16 %v586
        %v1906 = vunpack.c.h.b16 %v586
        %v1907 = vunpack.c.l.b16 %v587
        %v1908 = vunpack.c.h.b16 %v587
        %v1909 = vunpack.c.l.b16 %v588
        %v1910 = vunpack.c.h.b16 %v588
        %v1911 = vunpack.c.l.b16 %v589
        %v1912 = vunpack.c.h.b16 %v589
        %v1913 = vunpack.c.l.b16 %v590
        %v1914 = vunpack.c.h.b16 %v590
        %v1915 = vunpack.c.l.b16 %v591
        %v1916 = vunpack.c.h.b16 %v591
        %v1917 = vunpack.c.l.b16 %v592
        %v1918 = vunpack.c.h.b16 %v592
        %v1919 = vunpack.c.l.b16 %v593
        %v1920 = vunpack.c.h.b16 %v593
        %v1921 = vunpack.c.l.b16 %v594
        %v1922 = vunpack.c.h.b16 %v594
        %v1923 = vunpack.c.l.b16 %v595
        %v1924 = vunpack.c.h.b16 %v595
        %v1925 = vunpack.c.l.b16 %v596
        %v1926 = vunpack.c.h.b16 %v596
        %v1927 = vunpack.c.l.b16 %v597
        %v1928 = vunpack.c.h.b16 %v597
        %v1929 = vunpack.c.l.b16 %v598
        %v1930 = vunpack.c.h.b16 %v598
        %v1931 = vunpack.c.l.b16 %v599
        %v1932 = vunpack.c.h.b16 %v599
        %v1933 = vunpack.c.l.b16 %v600
        %v1934 = vunpack.c.h.b16 %v600
        %v1935 = vunpack.c.l.b16 %v601
        %v1936 = vunpack.c.h.b16 %v601
        %v1937 = vunpack.c.l.b16 %v602
        %v1938 = vunpack.c.h.b16 %v602
        %v1939 = vunpack.c.l.b16 %v603
        %v1940 = vunpack.c.h.b16 %v603
        %v1941 = vunpack.c.l.b16 %v604
        %v1942 = vunpack.c.h.b16 %v604
        %v1943 = vunpack.c.l.b16 %v605
        %v1944 = vunpack.c.h.b16 %v605
        %v1945 = vunpack.c.l.b16 %v606
        %v1946 = vunpack.c.h.b16 %v606
        %v1947 = vunpack.c.l.b16 %v607
        %v1948 = vunpack.c.h.b16 %v607
        %v1949 = vunpack.c.l.b16 %v608
        %v1950 = vunpack.c.h.b16 %v608
        %v1951 = vunpack.c.l.b16 %v609
        %v1952 = vunpack.c.h.b16 %v609
        %v1953 = vunpack.c.l.b16 %v610
        %v1954 = vunpack.c.h.b16 %v610
        %v1955 = vunpack.c.l.b16 %v611
        %v1956 = vunpack.c.h.b16 %v611
        %v1957 = vunpack.c.l.b16 %v612
        %v1958 = vunpack.c.h.b16 %v612
        %v1959 = vunpack.c.l.b16 %v613
        %v1960 = vunpack.c.h.b16 %v613
        %v1961 = vunpack.c.l.b16 %v614
        %v1962 = vunpack.c.h.b16 %v614
        %v1963 = vunpack.c.l.b16 %v615
        %v1964 = vunpack.c.h.b16 %v615
        %v1965 = vunpack.c.l.b16 %v616
        %v1966 = vunpack.c.h.b16 %v616
        %v1967 = vunpack.c.l.b16 %v617
        %v1968 = vunpack.c.h.b16 %v617
        %v1969 = vunpack.c.l.b16 %v618
        %v1970 = vunpack.c.h.b16 %v618
        %v1971 = vunpack.c.l.b16 %v619
        %v1972 = vunpack.c.h.b16 %v619
        %v1973 = vunpack.c.l.b16 %v620
        %v1974 = vunpack.c.h.b16 %v620
        %v1975 = vunpack.c.l.b16 %v621
        %v1976 = vunpack.c.h.b16 %v621
        %v1977 = vunpack.c.l.b16 %v622
        %v1978 = vunpack.c.h.b16 %v622
        %v1979 = vunpack.c.l.b16 %v623
        %v1980 = vunpack.c.h.b16 %v623
        %v1981 = vunpack.c.l.b16 %v624
        %v1982 = vunpack.c.h.b16 %v624
        %v1983 = vunpack.c.l.b16 %v625
        %v1984 = vunpack.c.h.b16 %v625
        %v1985 = vunpack.c.l.b16 %v626
        %v1986 = vunpack.c.h.b16 %v626
        %v1987 = vunpack.c.l.b16 %v627
        %v1988 = vunpack.c.h.b16 %v627
        %v1989 = vunpack.c.l.b16 %v628
        %v1990 = vunpack.c.h.b16 %v628
        %v1991 = vunpack.c.l.b16 %v629
        %v1992 = vunpack.c.h.b16 %v629
        %v1993 = vunpack.c.l.b16 %v630
        %v1994 = vunpack.c.h.b16 %v630
        %v1995 = vpack.c.b16 %v1113, %v1099
        %v1996 = vpack.c.b16 %v1114, %v1100
        %v1997 = vpack.c.b16 %v1115, %v1101
        %v1998 = vpack.c.b16 %v1116, %v1102
        %v1999 = vpack.c.b16 %v1117, %v1103
        %v2000 = vpack.c.b16 %v1118, %v1104
        %v2001 = vpack.c.b16 %v1119, %v1105
        %v2002 = vpack.c.b16 %v1120, %v1106
        %v2003 = vpack.c.b16 %v1121, %v1107
        %v2004 = vpack.c.b16 %v1122, %v1108
        %v2005 = vpack.c.b16 %v1123, %v1109
        %v2006 = vpack.c.b16 %v1124, %v1110
        %v2007 = vpack.c.b16 %v1125, %v1111
        %v2008 = vpack.c.b16 %v1126, %v1112
        %v2009 = vpack.c.b16 %v1141, %v1127
        %v2010 = vpack.c.b16 %v1142, %v1128
        %v2011 = vpack.c.b16 %v1143, %v1129
        %v2012 = vpack.c.b16 %v1144, %v1130
        %v2013 = vpack.c.b16 %v1145, %v1131
        %v2014 = vpack.c.b16 %v1146, %v1132
        %v2015 = vpack.c.b16 %v1147, %v1133
        %v2016 = vpack.c.b16 %v1148, %v1134
        %v2017 = vpack.c.b16 %v1149, %v1135
        %v2018 = vpack.c.b16 %v1150, %v1136
        %v2019 = vpack.c.b16 %v1151, %v1137
        %v2020 = vpack.c.b16 %v1152, %v1138
        %v2021 = vpack.c.b16 %v1153, %v1139
        %v2022 = vpack.c.b16 %v1154, %v1140
        %v2023 = vpack.c.b16 %v1169, %v1155
        %v2024 = vpack.c.b16 %v1170, %v1156
        %v2025 = vpack.c.b16 %v1171, %v1157
        %v2026 = vpack.c.b16 %v1172, %v1158
        %v2027 = vpack.c.b16 %v1173, %v1159
        %v2028 = vpack.c.b16 %v1174, %v1160
        %v2029 = vpack.c.b16 %v1175, %v1161
        %v2030 = vpack.c.b16 %v1176, %v1162
        %v2031 = vpack.c.b16 %v1177, %v1163
        %v2032 = vpack.c.b16 %v1178, %v1164
        %v2033 = vpack.c.b16 %v1179, %v1165
        %v2034 = vpack.c.b16 %v1180, %v1166
        %v2035 = vpack.c.b16 %v1181, %v1167
        %v2036 = vpack.c.b16 %v1182, %v1168
        %v2037 = vpack.c.b16 %v1197, %v1183
        %v2038 = vpack.c.b16 %v1198, %v1184
        %v2039 = vpack.c.b16 %v1199, %v1185
        %v2040 = vpack.c.b16 %v1200, %v1186
        %v2041 = vpack.c.b16 %v1201, %v1187
        %v2042 = vpack.c.b16 %v1202, %v1188
        %v2043 = vpack.c.b16 %v1203, %v1189
        %v2044 = vpack.c.b16 %v1204, %v1190
        %v2045 = vpack.c.b16 %v1205, %v1191
        %v2046 = vpack.c.b16 %v1206, %v1192
        %v2047 = vpack.c.b16 %v1207, %v1193
        %v2048 = vpack.c.b16 %v1208, %v1194
        %v2049 = vpack.c.b16 %v1209, %v1195
        %v2050 = vpack.c.b16 %v1210, %v1196
        %v2051 = vpack.c.b16 %v1225, %v1211
        %v2052 = vpack.c.b16 %v1226, %v1212
        %v2053 = vpack.c.b16 %v1227, %v1213
        %v2054 = vpack.c.b16 %v1228, %v1214
        %v2055 = vpack.c.b16 %v1229, %v1215
        %v2056 = vpack.c.b16 %v1230, %v1216
        %v2057 = vpack.c.b16 %v1231, %v1217
        %v2058 = vpack.c.b16 %v1232, %v1218
        %v2059 = vpack.c.b16 %v1233, %v1219
        %v2060 = vpack.c.b16 %v1234, %v1220
        %v2061 = vpack.c.b16 %v1235, %v1221
        %v2062 = vpack.c.b16 %v1236, %v1222
        %v2063 = vpack.c.b16 %v1237, %v1223
        %v2064 = vpack.c.b16 %v1238, %v1224
        %v2065 = vpack.c.b16 %v1253, %v1239
        %v2066 = vpack.c.b16 %v1254, %v1240
        %v2067 = vpack.c.b16 %v1255, %v1241
        %v2068 = vpack.c.b16 %v1256, %v1242
        %v2069 = vpack.c.b16 %v1257, %v1243
        %v2070 = vpack.c.b16 %v1258, %v1244
        %v2071 = vpack.c.b16 %v1259, %v1245
        %v2072 = vpack.c.b16 %v1260, %v1246
        %v2073 = vpack.c.b16 %v1261, %v1247
        %v2074 = vpack.c.b16 %v1262, %v1248
        %v2075 = vpack.c.b16 %v1263, %v1249
        %v2076 = vpack.c.b16 %v1264, %v1250
        %v2077 = vpack.c.b16 %v1265, %v1251
        %v2078 = vpack.c.b16 %v1266, %v1252
        %v2079 = vpack.c.b16 %v1281, %v1267
        %v2080 = vpack.c.b16 %v1282, %v1268
        %v2081 = vpack.c.b16 %v1283, %v1269
        %v2082 = vpack.c.b16 %v1284, %v1270
        %v2083 = vpack.c.b16 %v1285, %v1271
        %v2084 = vpack.c.b16 %v1286, %v1272
        %v2085 = vpack.c.b16 %v1287, %v1273
        %v2086 = vpack.c.b16 %v1288, %v1274
        %v2087 = vpack.c.b16 %v1289, %v1275
        %v2088 = vpack.c.b16 %v1290, %v1276
        %v2089 = vpack.c.b16 %v1291, %v1277
        %v2090 = vpack.c.b16 %v1292, %v1278
        %v2091 = vpack.c.b16 %v1293, %v1279
        %v2092 = vpack.c.b16 %v1294, %v1280
        %v2093 = vpack.c.b16 %v1309, %v1295
        %v2094 = vpack.c.b16 %v1310, %v1296
        %v2095 = vpack.c.b16 %v1311, %v1297
        %v2096 = vpack.c.b16 %v1312, %v1298
        %v2097 = vpack.c.b16 %v1313, %v1299
        %v2098 = vpack.c.b16 %v1314, %v1300
        %v2099 = vpack.c.b16 %v1315, %v1301
        %v2100 = vpack.c.b16 %v1316, %v1302
        %v2101 = vpack.c.b16 %v1317, %v1303
        %v2102 = vpack.c.b16 %v1318, %v1304
        %v2103 = vpack.c.b16 %v1319, %v1305
        %v2104 = vpack.c.b16 %v1320, %v1306
        %v2105 = vpack.c.b16 %v1321, %v1307
        %v2106 = vpack.c.b16 %v1322, %v1308
        %v2107 = vpack.c.b16 %v1337, %v1323
        %v2108 = vpack.c.b16 %v1338, %v1324
        %v2109 = vpack.c.b16 %v1339, %v1325
        %v2110 = vpack.c.b16 %v1340, %v1326
        %v2111 = vpack.c.b16 %v1341, %v1327
        %v2112 = vpack.c.b16 %v1342, %v1328
        %v2113 = vpack.c.b16 %v1343, %v1329
        %v2114 = vpack.c.b16 %v1344, %v1330
        %v2115 = vpack.c.b16 %v1345, %v1331
        %v2116 = vpack.c.b16 %v1346, %v1332
        %v2117 = vpack.c.b16 %v1347, %v1333
        %v2118 = vpack.c.b16 %v1348, %v1334
        %v2119 = vpack.c.b16 %v1349, %v1335
        %v2120 = vpack.c.b16 %v1350, %v1336
        %v2121 = vpack.c.b16 %v1365, %v1351
        %v2122 = vpack.c.b16 %v1366, %v1352
        %v2123 = vpack.c.b16 %v1367, %v1353
        %v2124 = vpack.c.b16 %v1368, %v1354
        %v2125 = vpack.c.b16 %v1369, %v1355
        %v2126 = vpack.c.b16 %v1370, %v1356
        %v2127 = vpack.c.b16 %v1371, %v1357
        %v2128 = vpack.c.b16 %v1372, %v1358
        %v2129 = vpack.c.b16 %v1373, %v1359
        %v2130 = vpack.c.b16 %v1374, %v1360
        %v2131 = vpack.c.b16 %v1375, %v1361
        %v2132 = vpack.c.b16 %v1376, %v1362
        %v2133 = vpack.c.b16 %v1377, %v1363
        %v2134 = vpack.c.b16 %v1378, %v1364
        %v2135 = vpack.c.b16 %v1393, %v1379
        %v2136 = vpack.c.b16 %v1394, %v1380
        %v2137 = vpack.c.b16 %v1395, %v1381
        %v2138 = vpack.c.b16 %v1396, %v1382
        %v2139 = vpack.c.b16 %v1397, %v1383
        %v2140 = vpack.c.b16 %v1398, %v1384
        %v2141 = vpack.c.b16 %v1399, %v1385
        %v2142 = vpack.c.b16 %v1400, %v1386
        %v2143 = vpack.c.b16 %v1401, %v1387
        %v2144 = vpack.c.b16 %v1402, %v1388
        %v2145 = vpack.c.b16 %v1403, %v1389
        %v2146 = vpack.c.b16 %v1404, %v1390
        %v2147 = vpack.c.b16 %v1405, %v1391
        %v2148 = vpack.c.b16 %v1406, %v1392
        %v2149 = vpack.c.b16 %v1421, %v1407
        %v2150 = vpack.c.b16 %v1422, %v1408
        %v2151 = vpack.c.b16 %v1423, %v1409
        %v2152 = vpack.c.b16 %v1424, %v1410
        %v2153 = vpack.c.b16 %v1425, %v1411
        %v2154 = vpack.c.b16 %v1426, %v1412
        %v2155 = vpack.c.b16 %v1427, %v1413
        %v2156 = vpack.c.b16 %v1428, %v1414
        %v2157 = vpack.c.b16 %v1429, %v1415
        %v2158 = vpack.c.b16 %v1430, %v1416
        %v2159 = vpack.c.b16 %v1431, %v1417
        %v2160 = vpack.c.b16 %v1432, %v1418
        %v2161 = vpack.c.b16 %v1433, %v1419
        %v2162 = vpack.c.b16 %v1434, %v1420
        %v2163 = vpack.c.b16 %v1449, %v1435
        %v2164 = vpack.c.b16 %v1450, %v1436
        %v2165 = vpack.c.b16 %v1451, %v1437
        %v2166 = vpack.c.b16 %v1452, %v1438
        %v2167 = vpack.c.b16 %v1453, %v1439
        %v2168 = vpack.c.b16 %v1454, %v1440
        %v2169 = vpack.c.b16 %v1455, %v1441
        %v2170 = vpack.c.b16 %v1456, %v1442
        %v2171 = vpack.c.b16 %v1457, %v1443
        %v2172 = vpack.c.b16 %v1458, %v1444
        %v2173 = vpack.c.b16 %v1459, %v1445
        %v2174 = vpack.c.b16 %v1460, %v1446
        %v2175 = vpack.c.b16 %v1461, %v1447
        %v2176 = vpack.c.b16 %v1462, %v1448
        %v2177 = vpack.c.b16 %v1477, %v1463
        %v2178 = vpack.c.b16 %v1478, %v1464
        %v2179 = vpack.c.b16 %v1479, %v1465
        %v2180 = vpack.c.b16 %v1480, %v1466
        %v2181 = vpack.c.b16 %v1481, %v1467
        %v2182 = vpack.c.b16 %v1482, %v1468
        %v2183 = vpack.c.b16 %v1483, %v1469
        %v2184 = vpack.c.b16 %v1484, %v1470
        %v2185 = vpack.c.b16 %v1485, %v1471
        %v2186 = vpack.c.b16 %v1486, %v1472
        %v2187 = vpack.c.b16 %v1487, %v1473
        %v2188 = vpack.c.b16 %v1488, %v1474
        %v2189 = vpack.c.b16 %v1489, %v1475
        %v2190 = vpack.c.b16 %v1490, %v1476
        %v2191 = vpack.c.b16 %v1505, %v1491
        %v2192 = vpack.c.b16 %v1506, %v1492
        %v2193 = vpack.c.b16 %v1507, %v1493
        %v2194 = vpack.c.b16 %v1508, %v1494
        %v2195 = vpack.c.b16 %v1509, %v1495
        %v2196 = vpack.c.b16 %v1510, %v1496
        %v2197 = vpack.c.b16 %v1511, %v1497
        %v2198 = vpack.c.b16 %v1512, %v1498
        %v2199 = vpack.c.b16 %v1513, %v1499
        %v2200 = vpack.c.b16 %v1514, %v1500
        %v2201 = vpack.c.b16 %v1515, %v1501
        %v2202 = vpack.c.b16 %v1516, %v1502
        %v2203 = vpack.c.b16 %v1517, %v1503
        %v2204 = vpack.c.b16 %v1518, %v1504
        %v2205 = vpack.c.b16 %v1533, %v1519
        %v2206 = vpack.c.b16 %v1534, %v1520
        %v2207 = vpack.c.b16 %v1535, %v1521
        %v2208 = vpack.c.b16 %v1536, %v1522
        %v2209 = vpack.c.b16 %v1537, %v1523
        %v2210 = vpack.c.b16 %v1538, %v1524
        %v2211 = vpack.c.b16 %v1539, %v1525
        %v2212 = vpack.c.b16 %v1540, %v1526
        %v2213 = vpack.c.b16 %v1541, %v1527
        %v2214 = vpack.c.b16 %v1542, %v1528
        %v2215 = vpack.c.b16 %v1543, %v1529
        %v2216 = vpack.c.b16 %v1544, %v1530
        %v2217 = vpack.c.b16 %v1545, %v1531
        %v2218 = vpack.c.b16 %v1546, %v1532
        %v2219 = vpack.c.b16 %v1561, %v1547
        %v2220 = vpack.c.b16 %v1562, %v1548
        %v2221 = vpack.c.b16 %v1563, %v1549
        %v2222 = vpack.c.b16 %v1564, %v1550
        %v2223 = vpack.c.b16 %v1565, %v1551
        %v2224 = vpack.c.b16 %v1566, %v1552
        %v2225 = vpack.c.b16 %v1567, %v1553
        %v2226 = vpack.c.b16 %v1568, %v1554
        %v2227 = vpack.c.b16 %v1569, %v1555
        %v2228 = vpack.c.b16 %v1570, %v1556
        %v2229 = vpack.c.b16 %v1571, %v1557
        %v2230 = vpack.c.b16 %v1572, %v1558
        %v2231 = vpack.c.b16 %v1573, %v1559
        %v2232 = vpack.c.b16 %v1574, %v1560
        %v2233 = vpack.c.b16 %v1589, %v1575
        %v2234 = vpack.c.b16 %v1590, %v1576
        %v2235 = vpack.c.b16 %v1591, %v1577
        %v2236 = vpack.c.b16 %v1592, %v1578
        %v2237 = vpack.c.b16 %v1593, %v1579
        %v2238 = vpack.c.b16 %v1594, %v1580
        %v2239 = vpack.c.b16 %v1595, %v1581
        %v2240 = vpack.c.b16 %v1596, %v1582
        %v2241 = vpack.c.b16 %v1597, %v1583
        %v2242 = vpack.c.b16 %v1598, %v1584
        %v2243 = vpack.c.b16 %v1599, %v1585
        %v2244 = vpack.c.b16 %v1600, %v1586
        %v2245 = vpack.c.b16 %v1601, %v1587
        %v2246 = vpack.c.b16 %v1602, %v1588
        %v2247 = vpack.c.b16 %v1617, %v1603
        %v2248 = vpack.c.b16 %v1618, %v1604
        %v2249 = vpack.c.b16 %v1619, %v1605
        %v2250 = vpack.c.b16 %v1620, %v1606
        %v2251 = vpack.c.b16 %v1621, %v1607
        %v2252 = vpack.c.b16 %v1622, %v1608
        %v2253 = vpack.c.b16 %v1623, %v1609
        %v2254 = vpack.c.b16 %v1624, %v1610
        %v2255 = vpack.c.b16 %v1625, %v1611
        %v2256 = vpack.c.b16 %v1626, %v1612
        %v2257 = vpack.c.b16 %v1627, %v1613
        %v2258 = vpack.c.b16 %v1628, %v1614
        %v2259 = vpack.c.b16 %v1629, %v1615
        %v2260 = vpack.c.b16 %v1630, %v1616
        %v2261 = vpack.c.b16 %v1645, %v1631
        %v2262 = vpack.c.b16 %v1646, %v1632
        %v2263 = vpack.c.b16 %v1647, %v1633
        %v2264 = vpack.c.b16 %v1648, %v1634
        %v2265 = vpack.c.b16 %v1649, %v1635
        %v2266 = vpack.c.b16 %v1650, %v1636
        %v2267 = vpack.c.b16 %v1651, %v1637
        %v2268 = vpack.c.b16 %v1652, %v1638
        %v2269 = vpack.c.b16 %v1653, %v1639
        %v2270 = vpack.c.b16 %v1654, %v1640
        %v2271 = vpack.c.b16 %v1655, %v1641
        %v2272 = vpack.c.b16 %v1656, %v1642
        %v2273 = vpack.c.b16 %v1657, %v1643
        %v2274 = vpack.c.b16 %v1658, %v1644
        %v2275 = vpack.c.b16 %v1673, %v1659
        %v2276 = vpack.c.b16 %v1674, %v1660
        %v2277 = vpack.c.b16 %v1675, %v1661
        %v2278 = vpack.c.b16 %v1676, %v1662
        %v2279 = vpack.c.b16 %v1677, %v1663
        %v2280 = vpack.c.b16 %v1678, %v1664
        %v2281 = vpack.c.b16 %v1679, %v1665
        %v2282 = vpack.c.b16 %v1680, %v1666
        %v2283 = vpack.c.b16 %v1681, %v1667
        %v2284 = vpack.c.b16 %v1682, %v1668
        %v2285 = vpack.c.b16 %v1683, %v1669
        %v2286 = vpack.c.b16 %v1684, %v1670
        %v2287 = vpack.c.b16 %v1685, %v1671
        %v2288 = vpack.c.b16 %v1686, %v1672
        %v2289 = vpack.c.b16 %v1701, %v1687
        %v2290 = vpack.c.b16 %v1702, %v1688
        %v2291 = vpack.c.b16 %v1703, %v1689
        %v2292 = vpack.c.b16 %v1704, %v1690
        %v2293 = vpack.c.b16 %v1705, %v1691
        %v2294 = vpack.c.b16 %v1706, %v1692
        %v2295 = vpack.c.b16 %v1707, %v1693
        %v2296 = vpack.c.b16 %v1708, %v1694
        %v2297 = vpack.c.b16 %v1709, %v1695
        %v2298 = vpack.c.b16 %v1710, %v1696
        %v2299 = vpack.c.b16 %v1711, %v1697
        %v2300 = vpack.c.b16 %v1712, %v1698
        %v2301 = vpack.c.b16 %v1713, %v1699
        %v2302 = vpack.c.b16 %v1714, %v1700
        %v2303 = vpack.c.b16 %v1729, %v1715
        %v2304 = vpack.c.b16 %v1730, %v1716
        %v2305 = vpack.c.b16 %v1731, %v1717
        %v2306 = vpack.c.b16 %v1732, %v1718
        %v2307 = vpack.c.b16 %v1733, %v1719
        %v2308 = vpack.c.b16 %v1734, %v1720
        %v2309 = vpack.c.b16 %v1735, %v1721
        %v2310 = vpack.c.b16 %v1736, %v1722
        %v2311 = vpack.c.b16 %v1737, %v1723
        %v2312 = vpack.c.b16 %v1738, %v1724
        %v2313 = vpack.c.b16 %v1739, %v1725
        %v2314 = vpack.c.b16 %v1740, %v1726
        %v2315 = vpack.c.b16 %v1741, %v1727
        %v2316 = vpack.c.b16 %v1742, %v1728
        %v2317 = vpack.c.b16 %v1757, %v1743
        %v2318 = vpack.c.b16 %v1758, %v1744
        %v2319 = vpack.c.b16 %v1759, %v1745
        %v2320 = vpack.c.b16 %v1760, %v1746
        %v2321 = vpack.c.b16 %v1761, %v1747
        %v2322 = vpack.c.b16 %v1762, %v1748
        %v2323 = vpack.c.b16 %v1763, %v1749
        %v2324 = vpack.c.b16 %v1764, %v1750
        %v2325 = vpack.c.b16 %v1765, %v1751
        %v2326 = vpack.c.b16 %v1766, %v1752
        %v2327 = vpack.c.b16 %v1767, %v1753
        %v2328 = vpack.c.b16 %v1768, %v1754
        %v2329 = vpack.c.b16 %v1769, %v1755
        %v2330 = vpack.c.b16 %v1770, %v1756
        %v2331 = vpack.c.b16 %v1785, %v1771
        %v2332 = vpack.c.b16 %v1786, %v1772
        %v2333 = vpack.c.b16 %v1787, %v1773
        %v2334 = vpack.c.b16 %v1788, %v1774
        %v2335 = vpack.c.b16 %v1789, %v1775
        %v2336 = vpack.c.b16 %v1790, %v1776
        %v2337 = vpack.c.b16 %v1791, %v1777
        %v2338 = vpack.c.b16 %v1792, %v1778
        %v2339 = vpack.c.b16 %v1793, %v1779
        %v2340 = vpack.c.b16 %v1794, %v1780
        %v2341 = vpack.c.b16 %v1795, %v1781
        %v2342 = vpack.c.b16 %v1796, %v1782
        %v2343 = vpack.c.b16 %v1797, %v1783
        %v2344 = vpack.c.b16 %v1798, %v1784
        %v2345 = vpack.c.b16 %v1813, %v1799
        %v2346 = vpack.c.b16 %v1814, %v1800
        %v2347 = vpack.c.b16 %v1815, %v1801
        %v2348 = vpack.c.b16 %v1816, %v1802
        %v2349 = vpack.c.b16 %v1817, %v1803
        %v2350 = vpack.c.b16 %v1818, %v1804
        %v2351 = vpack.c.b16 %v1819, %v1805
        %v2352 = vpack.c.b16 %v1820, %v1806
        %v2353 = vpack.c.b16 %v1821, %v1807
        %v2354 = vpack.c.b16 %v1822, %v1808
        %v2355 = vpack.c.b16 %v1823, %v1809
        %v2356 = vpack.c.b16 %v1824, %v1810
        %v2357 = vpack.c.b16 %v1825, %v1811
        %v2358 = vpack.c.b16 %v1826, %v1812
        %v2359 = vpack.c.b16 %v1841, %v1827
        %v2360 = vpack.c.b16 %v1842, %v1828
        %v2361 = vpack.c.b16 %v1843, %v1829
        %v2362 = vpack.c.b16 %v1844, %v1830
        %v2363 = vpack.c.b16 %v1845, %v1831
        %v2364 = vpack.c.b16 %v1846, %v1832
        %v2365 = vpack.c.b16 %v1847, %v1833
        %v2366 = vpack.c.b16 %v1848, %v1834
        %v2367 = vpack.c.b16 %v1849, %v1835
        %v2368 = vpack.c.b16 %v1850, %v1836
        %v2369 = vpack.c.b16 %v1851, %v1837
        %v2370 = vpack.c.b16 %v1852, %v1838
        %v2371 = vpack.c.b16 %v1853, %v1839
        %v2372 = vpack.c.b16 %v1854, %v1840
        %v2373 = vpack.c.b16 %v1869, %v1855
        %v2374 = vpack.c.b16 %v1870, %v1856
        %v2375 = vpack.c.b16 %v1871, %v1857
        %v2376 = vpack.c.b16 %v1872, %v1858
        %v2377 = vpack.c.b16 %v1873, %v1859
        %v2378 = vpack.c.b16 %v1874, %v1860
        %v2379 = vpack.c.b16 %v1875, %v1861
        %v2380 = vpack.c.b16 %v1876, %v1862
        %v2381 = vpack.c.b16 %v1877, %v1863
        %v2382 = vpack.c.b16 %v1878, %v1864
        %v2383 = vpack.c.b16 %v1879, %v1865
        %v2384 = vpack.c.b16 %v1880, %v1866
        %v2385 = vpack.c.b16 %v1881, %v1867
        %v2386 = vpack.c.b16 %v1882, %v1868
        %v2387 = vpack.c.b16 %v1897, %v1883
        %v2388 = vpack.c.b16 %v1898, %v1884
        %v2389 = vpack.c.b16 %v1899, %v1885
        %v2390 = vpack.c.b16 %v1900, %v1886
        %v2391 = vpack.c.b16 %v1901, %v1887
        %v2392 = vpack.c.b16 %v1902, %v1888
        %v2393 = vpack.c.b16 %v1903, %v1889
        %v2394 = vpack.c.b16 %v1904, %v1890
        %v2395 = vpack.c.b16 %v1905, %v1891
        %v2396 = vpack.c.b16 %v1906, %v1892
        %v2397 = vpack.c.b16 %v1907, %v1893
        %v2398 = vpack.c.b16 %v1908, %v1894
        %v2399 = vpack.c.b16 %v1909, %v1895
        %v2400 = vpack.c.b16 %v1910, %v1896
        %v2401 = vpack.c.b16 %v1925, %v1911
        %v2402 = vpack.c.b16 %v1926, %v1912
        %v2403 = vpack.c.b16 %v1927, %v1913
        %v2404 = vpack.c.b16 %v1928, %v1914
        %v2405 = vpack.c.b16 %v1929, %v1915
        %v2406 = vpack.c.b16 %v1930, %v1916
        %v2407 = vpack.c.b16 %v1931, %v1917
        %v2408 = vpack.c.b16 %v1932, %v1918
        %v2409 = vpack.c.b16 %v1933, %v1919
        %v2410 = vpack.c.b16 %v1934, %v1920
        %v2411 = vpack.c.b16 %v1935, %v1921
        %v2412 = vpack.c.b16 %v1936, %v1922
        %v2413 = vpack.c.b16 %v1937, %v1923
        %v2414 = vpack.c.b16 %v1938, %v1924
        %v2415 = vpack.c.b16 %v1953, %v1939
        %v2416 = vpack.c.b16 %v1954, %v1940
        %v2417 = vpack.c.b16 %v1955, %v1941
        %v2418 = vpack.c.b16 %v1956, %v1942
        %v2419 = vpack.c.b16 %v1957, %v1943
        %v2420 = vpack.c.b16 %v1958, %v1944
        %v2421 = vpack.c.b16 %v1959, %v1945
        %v2422 = vpack.c.b16 %v1960, %v1946
        %v2423 = vpack.c.b16 %v1961, %v1947
        %v2424 = vpack.c.b16 %v1962, %v1948
        %v2425 = vpack.c.b16 %v1963, %v1949
        %v2426 = vpack.c.b16 %v1964, %v1950
        %v2427 = vpack.c.b16 %v1965, %v1951
        %v2428 = vpack.c.b16 %v1966, %v1952
        %v2429 = vpack.c.b16 %v1981, %v1967
        %v2430 = vpack.c.b16 %v1982, %v1968
        %v2431 = vpack.c.b16 %v1983, %v1969
        %v2432 = vpack.c.b16 %v1984, %v1970
        %v2433 = vpack.c.b16 %v1985, %v1971
        %v2434 = vpack.c.b16 %v1986, %v1972
        %v2435 = vpack.c.b16 %v1987, %v1973
        %v2436 = vpack.c.b16 %v1988, %v1974
        %v2437 = vpack.c.b16 %v1989, %v1975
        %v2438 = vpack.c.b16 %v1990, %v1976
        %v2439 = vpack.c.b16 %v1991, %v1977
        %v2440 = vpack.c.b16 %v1992, %v1978
        %v2441 = vpack.c.b16 %v1993, %v1979
        %v2442 = vpack.c.b16 %v1994, %v1980
        %2891 = vmatprep.subr.bf16.mxu0 %v1996
        %2892 = vmatpush1.bf16.msra.mxu0 %v1995
        %2893 = vmatprep.subr.bf16.mxu0 %v2010
        %2894 = vmatpush1.bf16.msra.mxu0 %v2009
        %2895 = vmatprep.subr.bf16.mxu0 %v2024
        %2896 = vmatpush1.bf16.msra.mxu0 %v2023
        %2897 = vmatprep.subr.bf16.mxu0 %v2038
        %2898 = vmatpush1.bf16.msra.mxu0 %v2037
        %2899 = vmatprep.subr.bf16.mxu0 %v2052
        %2900 = vmatpush1.bf16.msra.mxu0 %v2051
        %2901 = vmatprep.subr.bf16.mxu0 %v2066
        %2902 = vmatpush1.bf16.msra.mxu0 %v2065
        %2903 = vmatprep.subr.bf16.mxu0 %v2080
        %2904 = vmatpush1.bf16.msra.mxu0 %v2079
        %2905 = vmatprep.subr.bf16.mxu0 %v2094
        %2906 = vmatpush1.bf16.msra.mxu0 %v2093
        %2907 = vmatprep.subr.bf16.mxu0 %v2108
        %2908 = vmatpush1.bf16.msra.mxu0 %v2107
        %2909 = vmatprep.subr.bf16.mxu0 %v2122
        %2910 = vmatpush1.bf16.msra.mxu0 %v2121
        %2911 = vmatprep.subr.bf16.mxu0 %v2136
        %2912 = vmatpush1.bf16.msra.mxu0 %v2135
        %2913 = vmatprep.subr.bf16.mxu0 %v2150
        %2914 = vmatpush1.bf16.msra.mxu0 %v2149
        %2915 = vmatprep.subr.bf16.mxu0 %v2164
        %2916 = vmatpush1.bf16.msra.mxu0 %v2163
        %2917 = vmatprep.subr.bf16.mxu0 %v2178
        %2918 = vmatpush1.bf16.msra.mxu0 %v2177
        %2919 = vmatprep.subr.bf16.mxu0 %v2192
        %2920 = vmatpush1.bf16.msra.mxu0 %v2191
        %2921 = vmatprep.subr.bf16.mxu0 %v2206
        %2922 = vmatpush1.bf16.msra.mxu0 %v2205
        %2923 = vmatprep.mubr.bf16.mxu0 %v644
        %2924 = vmatmul.mubr.bf16.gmra.mrb[0].mxu0 %v643
        %v2925 = vpop.f32.mrb[0].mxu0
        %v2926 = vadd.f32 0.0, %v2925
        %v2927 = vpop.f32.mrb[0].mxu0
        %v2928 = vadd.f32 0.0, %v2927
        %v2929 = vpop.f32.mrb[0].mxu0
        %v2930 = vadd.f32 0.0, %v2929
        %v2931 = vpop.f32.mrb[0].mxu0
        %v2932 = vadd.f32 0.0, %v2931
        %2933 = vdwg.mxu0
        %2934 = vmatprep.subr.bf16.mxu0 %v2220
        %2935 = vmatpush1.bf16.msra.mxu0 %v2219
        %2936 = vmatprep.subr.bf16.mxu0 %v2234
        %2937 = vmatpush1.bf16.msra.mxu0 %v2233
        %2938 = vmatprep.subr.bf16.mxu0 %v2248
        %2939 = vmatpush1.bf16.msra.mxu0 %v2247
        %2940 = vmatprep.subr.bf16.mxu0 %v2262
        %2941 = vmatpush1.bf16.msra.mxu0 %v2261
        %2942 = vmatprep.subr.bf16.mxu0 %v2276
        %2943 = vmatpush1.bf16.msra.mxu0 %v2275
        %2944 = vmatprep.subr.bf16.mxu0 %v2290
        %2945 = vmatpush1.bf16.msra.mxu0 %v2289
        %2946 = vmatprep.subr.bf16.mxu0 %v2304
        %2947 = vmatpush1.bf16.msra.mxu0 %v2303
        %2948 = vmatprep.subr.bf16.mxu0 %v2318
        %2949 = vmatpush1.bf16.msra.mxu0 %v2317
        %2950 = vmatprep.subr.bf16.mxu0 %v2332
        %2951 = vmatpush1.bf16.msra.mxu0 %v2331
        %2952 = vmatprep.subr.bf16.mxu0 %v2346
        %2953 = vmatpush1.bf16.msra.mxu0 %v2345
        %2954 = vmatprep.subr.bf16.mxu0 %v2360
        %2955 = vmatpush1.bf16.msra.mxu0 %v2359
        %2956 = vmatprep.subr.bf16.mxu0 %v2374
        %2957 = vmatpush1.bf16.msra.mxu0 %v2373
        %2958 = vmatprep.subr.bf16.mxu0 %v2388
        %2959 = vmatpush1.bf16.msra.mxu0 %v2387
        %2960 = vmatprep.subr.bf16.mxu0 %v2402
        %2961 = vmatpush1.bf16.msra.mxu0 %v2401
        %2962 = vmatprep.subr.bf16.mxu0 %v2416
        %2963 = vmatpush1.bf16.msra.mxu0 %v2415
        %2964 = vmatprep.subr.bf16.mxu0 %v2430
        %2965 = vmatpush1.bf16.msra.mxu0 %v2429
        %2966 = vmatprep.mubr.bf16.mxu0 %v646
        %2967 = vmatmul.mubr.bf16.gmra.mrb[0].mxu0 %v645
        %v2968 = vpop.f32.mrb[0].mxu0
        %v2969 = vadd.f32 %v2926, %v2968
        %v2970 = vpop.f32.mrb[0].mxu0
        %v2971 = vadd.f32 %v2928, %v2970
        %v2972 = vpop.f32.mrb[0].mxu0
        %v2973 = vadd.f32 %v2930, %v2972
        %v2974 = vpop.f32.mrb[0].mxu0
        %v2975 = vadd.f32 %v2932, %v2974
        %2976 = vdwg.mxu0
        %2977 = vmatprep.subr.bf16.mxu0 %v1998
        %2978 = vmatpush1.bf16.msra.mxu0 %v1997
        %2979 = vmatprep.subr.bf16.mxu0 %v2012
        %2980 = vmatpush1.bf16.msra.mxu0 %v2011
        %2981 = vmatprep.subr.bf16.mxu0 %v2026
        %2982 = vmatpush1.bf16.msra.mxu0 %v2025
        %2983 = vmatprep.subr.bf16.mxu0 %v2040
        %2984 = vmatpush1.bf16.msra.mxu0 %v2039
        %2985 = vmatprep.subr.bf16.mxu0 %v2054
        %2986 = vmatpush1.bf16.msra.mxu0 %v2053
        %2987 = vmatprep.subr.bf16.mxu0 %v2068
        %2988 = vmatpush1.bf16.msra.mxu0 %v2067
        %2989 = vmatprep.subr.bf16.mxu0 %v2082
        %2990 = vmatpush1.bf16.msra.mxu0 %v2081
        %2991 = vmatprep.subr.bf16.mxu0 %v2096
        %2992 = vmatpush1.bf16.msra.mxu0 %v2095
        %2993 = vmatprep.subr.bf16.mxu0 %v2110
        %2994 = vmatpush1.bf16.msra.mxu0 %v2109
        %2995 = vmatprep.subr.bf16.mxu0 %v2124
        %2996 = vmatpush1.bf16.msra.mxu0 %v2123
        %2997 = vmatprep.subr.bf16.mxu0 %v2138
        %2998 = vmatpush1.bf16.msra.mxu0 %v2137
        %2999 = vmatprep.subr.bf16.mxu0 %v2152
        %3000 = vmatpush1.bf16.msra.mxu0 %v2151
        %3001 = vmatprep.subr.bf16.mxu0 %v2166
        %3002 = vmatpush1.bf16.msra.mxu0 %v2165
        %3003 = vmatprep.subr.bf16.mxu0 %v2180
        %3004 = vmatpush1.bf16.msra.mxu0 %v2179
        %3005 = vmatprep.subr.bf16.mxu0 %v2194
        %3006 = vmatpush1.bf16.msra.mxu0 %v2193
        %3007 = vmatprep.subr.bf16.mxu0 %v2208
        %3008 = vmatpush1.bf16.msra.mxu0 %v2207
        %3009 = vmatprep.mubr.bf16.mxu0 %v644
        %3010 = vmatmul.mubr.bf16.gmra.mrb[0].mxu0 %v643
        %v3011 = vpop.f32.mrb[0].mxu0
        %v3012 = vadd.f32 0.0, %v3011
        %v3013 = vpop.f32.mrb[0].mxu0
        %v3014 = vadd.f32 0.0, %v3013
        %v3015 = vpop.f32.mrb[0].mxu0
        %v3016 = vadd.f32 0.0, %v3015
        %v3017 = vpop.f32.mrb[0].mxu0
        %v3018 = vadd.f32 0.0, %v3017
        %3019 = vdwg.mxu0
        %3020 = vmatprep.subr.bf16.mxu0 %v2222
        %3021 = vmatpush1.bf16.msra.mxu0 %v2221
        %3022 = vmatprep.subr.bf16.mxu0 %v2236
        %3023 = vmatpush1.bf16.msra.mxu0 %v2235
        %3024 = vmatprep.subr.bf16.mxu0 %v2250
        %3025 = vmatpush1.bf16.msra.mxu0 %v2249
        %3026 = vmatprep.subr.bf16.mxu0 %v2264
        %3027 = vmatpush1.bf16.msra.mxu0 %v2263
        %3028 = vmatprep.subr.bf16.mxu0 %v2278
        %3029 = vmatpush1.bf16.msra.mxu0 %v2277
        %3030 = vmatprep.subr.bf16.mxu0 %v2292
        %3031 = vmatpush1.bf16.msra.mxu0 %v2291
        %3032 = vmatprep.subr.bf16.mxu0 %v2306
        %3033 = vmatpush1.bf16.msra.mxu0 %v2305
        %3034 = vmatprep.subr.bf16.mxu0 %v2320
        %3035 = vmatpush1.bf16.msra.mxu0 %v2319
        %3036 = vmatprep.subr.bf16.mxu0 %v2334
        %3037 = vmatpush1.bf16.msra.mxu0 %v2333
        %3038 = vmatprep.subr.bf16.mxu0 %v2348
        %3039 = vmatpush1.bf16.msra.mxu0 %v2347
        %3040 = vmatprep.subr.bf16.mxu0 %v2362
        %3041 = vmatpush1.bf16.msra.mxu0 %v2361
        %3042 = vmatprep.subr.bf16.mxu0 %v2376
        %3043 = vmatpush1.bf16.msra.mxu0 %v2375
        %3044 = vmatprep.subr.bf16.mxu0 %v2390
        %3045 = vmatpush1.bf16.msra.mxu0 %v2389
        %3046 = vmatprep.subr.bf16.mxu0 %v2404
        %3047 = vmatpush1.bf16.msra.mxu0 %v2403
        %3048 = vmatprep.subr.bf16.mxu0 %v2418
        %3049 = vmatpush1.bf16.msra.mxu0 %v2417
        %3050 = vmatprep.subr.bf16.mxu0 %v2432
        %3051 = vmatpush1.bf16.msra.mxu0 %v2431
        %3052 = vmatprep.mubr.bf16.mxu0 %v646
        %3053 = vmatmul.mubr.bf16.gmra.mrb[0].mxu0 %v645
        %v3054 = vpop.f32.mrb[0].mxu0
        %v3055 = vadd.f32 %v3012, %v3054
        %v3056 = vpop.f32.mrb[0].mxu0
        %v3057 = vadd.f32 %v3014, %v3056
        %v3058 = vpop.f32.mrb[0].mxu0
        %v3059 = vadd.f32 %v3016, %v3058
        %v3060 = vpop.f32.mrb[0].mxu0
        %v3061 = vadd.f32 %v3018, %v3060
        %3062 = vdwg.mxu0
        %3063 = vmatprep.subr.bf16.mxu0 %v2000
        %3064 = vmatpush1.bf16.msra.mxu0 %v1999
        %3065 = vmatprep.subr.bf16.mxu0 %v2014
        %3066 = vmatpush1.bf16.msra.mxu0 %v2013
        %3067 = vmatprep.subr.bf16.mxu0 %v2028
        %3068 = vmatpush1.bf16.msra.mxu0 %v2027
        %3069 = vmatprep.subr.bf16.mxu0 %v2042
        %3070 = vmatpush1.bf16.msra.mxu0 %v2041
        %3071 = vmatprep.subr.bf16.mxu0 %v2056
        %3072 = vmatpush1.bf16.msra.mxu0 %v2055
        %3073 = vmatprep.subr.bf16.mxu0 %v2070
        %3074 = vmatpush1.bf16.msra.mxu0 %v2069
        %3075 = vmatprep.subr.bf16.mxu0 %v2084
        %3076 = vmatpush1.bf16.msra.mxu0 %v2083
        %3077 = vmatprep.subr.bf16.mxu0 %v2098
        %3078 = vmatpush1.bf16.msra.mxu0 %v2097
        %3079 = vmatprep.subr.bf16.mxu0 %v2112
        %3080 = vmatpush1.bf16.msra.mxu0 %v2111
        %3081 = vmatprep.subr.bf16.mxu0 %v2126
        %3082 = vmatpush1.bf16.msra.mxu0 %v2125
        %3083 = vmatprep.subr.bf16.mxu0 %v2140
        %3084 = vmatpush1.bf16.msra.mxu0 %v2139
        %3085 = vmatprep.subr.bf16.mxu0 %v2154
        %3086 = vmatpush1.bf16.msra.mxu0 %v2153
        %3087 = vmatprep.subr.bf16.mxu0 %v2168
        %3088 = vmatpush1.bf16.msra.mxu0 %v2167
        %3089 = vmatprep.subr.bf16.mxu0 %v2182
        %3090 = vmatpush1.bf16.msra.mxu0 %v2181
        %3091 = vmatprep.subr.bf16.mxu0 %v2196
        %3092 = vmatpush1.bf16.msra.mxu0 %v2195
        %3093 = vmatprep.subr.bf16.mxu0 %v2210
        %3094 = vmatpush1.bf16.msra.mxu0 %v2209
        %3095 = vmatprep.mubr.bf16.mxu0 %v644
        %3096 = vmatmul.mubr.bf16.gmra.mrb[0].mxu0 %v643
        %v3097 = vpop.f32.mrb[0].mxu0
        %v3098 = vadd.f32 0.0, %v3097
        %v3099 = vpop.f32.mrb[0].mxu0
        %v3100 = vadd.f32 0.0, %v3099
        %v3101 = vpop.f32.mrb[0].mxu0
        %v3102 = vadd.f32 0.0, %v3101
        %v3103 = vpop.f32.mrb[0].mxu0
        %v3104 = vadd.f32 0.0, %v3103
        %3105 = vdwg.mxu0
        %3106 = vmatprep.subr.bf16.mxu0 %v2224
        %3107 = vmatpush1.bf16.msra.mxu0 %v2223
        %3108 = vmatprep.subr.bf16.mxu0 %v2238
        %3109 = vmatpush1.bf16.msra.mxu0 %v2237
        %3110 = vmatprep.subr.bf16.mxu0 %v2252
        %3111 = vmatpush1.bf16.msra.mxu0 %v2251
        %3112 = vmatprep.subr.bf16.mxu0 %v2266
        %3113 = vmatpush1.bf16.msra.mxu0 %v2265
        %3114 = vmatprep.subr.bf16.mxu0 %v2280
        %3115 = vmatpush1.bf16.msra.mxu0 %v2279
        %3116 = vmatprep.subr.bf16.mxu0 %v2294
        %3117 = vmatpush1.bf16.msra.mxu0 %v2293
        %3118 = vmatprep.subr.bf16.mxu0 %v2308
        %3119 = vmatpush1.bf16.msra.mxu0 %v2307
        %3120 = vmatprep.subr.bf16.mxu0 %v2322
        %3121 = vmatpush1.bf16.msra.mxu0 %v2321
        %3122 = vmatprep.subr.bf16.mxu0 %v2336
        %3123 = vmatpush1.bf16.msra.mxu0 %v2335
        %3124 = vmatprep.subr.bf16.mxu0 %v2350
        %3125 = vmatpush1.bf16.msra.mxu0 %v2349
        %3126 = vmatprep.subr.bf16.mxu0 %v2364
        %3127 = vmatpush1.bf16.msra.mxu0 %v2363
        %3128 = vmatprep.subr.bf16.mxu0 %v2378
        %3129 = vmatpush1.bf16.msra.mxu0 %v2377
        %3130 = vmatprep.subr.bf16.mxu0 %v2392
        %3131 = vmatpush1.bf16.msra.mxu0 %v2391
        %3132 = vmatprep.subr.bf16.mxu0 %v2406
        %3133 = vmatpush1.bf16.msra.mxu0 %v2405
        %3134 = vmatprep.subr.bf16.mxu0 %v2420
        %3135 = vmatpush1.bf16.msra.mxu0 %v2419
        %3136 = vmatprep.subr.bf16.mxu0 %v2434
        %3137 = vmatpush1.bf16.msra.mxu0 %v2433
        %3138 = vmatprep.mubr.bf16.mxu0 %v646
        %3139 = vmatmul.mubr.bf16.gmra.mrb[0].mxu0 %v645
        %v3140 = vpop.f32.mrb[0].mxu0
        %v3141 = vadd.f32 %v3098, %v3140
        %v3142 = vpop.f32.mrb[0].mxu0
        %v3143 = vadd.f32 %v3100, %v3142
        %v3144 = vpop.f32.mrb[0].mxu0
        %v3145 = vadd.f32 %v3102, %v3144
        %v3146 = vpop.f32.mrb[0].mxu0
        %v3147 = vadd.f32 %v3104, %v3146
        %3148 = vdwg.mxu0
        %3149 = vmatprep.subr.bf16.mxu0 %v2002
        %3150 = vmatpush1.bf16.msra.mxu0 %v2001
        %3151 = vmatprep.subr.bf16.mxu0 %v2016
        %3152 = vmatpush1.bf16.msra.mxu0 %v2015
        %3153 = vmatprep.subr.bf16.mxu0 %v2030
        %3154 = vmatpush1.bf16.msra.mxu0 %v2029
        %3155 = vmatprep.subr.bf16.mxu0 %v2044
        %3156 = vmatpush1.bf16.msra.mxu0 %v2043
        %3157 = vmatprep.subr.bf16.mxu0 %v2058
        %3158 = vmatpush1.bf16.msra.mxu0 %v2057
        %3159 = vmatprep.subr.bf16.mxu0 %v2072
        %3160 = vmatpush1.bf16.msra.mxu0 %v2071
        %3161 = vmatprep.subr.bf16.mxu0 %v2086
        %3162 = vmatpush1.bf16.msra.mxu0 %v2085
        %3163 = vmatprep.subr.bf16.mxu0 %v2100
        %3164 = vmatpush1.bf16.msra.mxu0 %v2099
        %3165 = vmatprep.subr.bf16.mxu0 %v2114
        %3166 = vmatpush1.bf16.msra.mxu0 %v2113
        %3167 = vmatprep.subr.bf16.mxu0 %v2128
        %3168 = vmatpush1.bf16.msra.mxu0 %v2127
        %3169 = vmatprep.subr.bf16.mxu0 %v2142
        %3170 = vmatpush1.bf16.msra.mxu0 %v2141
        %3171 = vmatprep.subr.bf16.mxu0 %v2156
        %3172 = vmatpush1.bf16.msra.mxu0 %v2155
        %3173 = vmatprep.subr.bf16.mxu0 %v2170
        %3174 = vmatpush1.bf16.msra.mxu0 %v2169
        %3175 = vmatprep.subr.bf16.mxu0 %v2184
        %3176 = vmatpush1.bf16.msra.mxu0 %v2183
        %3177 = vmatprep.subr.bf16.mxu0 %v2198
        %3178 = vmatpush1.bf16.msra.mxu0 %v2197
        %3179 = vmatprep.subr.bf16.mxu0 %v2212
        %3180 = vmatpush1.bf16.msra.mxu0 %v2211
        %3181 = vmatprep.mubr.bf16.mxu0 %v644
        %3182 = vmatmul.mubr.bf16.gmra.mrb[0].mxu0 %v643
        %v3183 = vpop.f32.mrb[0].mxu0
        %v3184 = vadd.f32 0.0, %v3183
        %v3185 = vpop.f32.mrb[0].mxu0
        %v3186 = vadd.f32 0.0, %v3185
        %v3187 = vpop.f32.mrb[0].mxu0
        %v3188 = vadd.f32 0.0, %v3187
        %v3189 = vpop.f32.mrb[0].mxu0
        %v3190 = vadd.f32 0.0, %v3189
        %3191 = vdwg.mxu0
        %3192 = vmatprep.subr.bf16.mxu0 %v2226
        %3193 = vmatpush1.bf16.msra.mxu0 %v2225
        %3194 = vmatprep.subr.bf16.mxu0 %v2240
        %3195 = vmatpush1.bf16.msra.mxu0 %v2239
        %3196 = vmatprep.subr.bf16.mxu0 %v2254
        %3197 = vmatpush1.bf16.msra.mxu0 %v2253
        %3198 = vmatprep.subr.bf16.mxu0 %v2268
        %3199 = vmatpush1.bf16.msra.mxu0 %v2267
        %3200 = vmatprep.subr.bf16.mxu0 %v2282
        %3201 = vmatpush1.bf16.msra.mxu0 %v2281
        %3202 = vmatprep.subr.bf16.mxu0 %v2296
        %3203 = vmatpush1.bf16.msra.mxu0 %v2295
        %3204 = vmatprep.subr.bf16.mxu0 %v2310
        %3205 = vmatpush1.bf16.msra.mxu0 %v2309
        %3206 = vmatprep.subr.bf16.mxu0 %v2324
        %3207 = vmatpush1.bf16.msra.mxu0 %v2323
        %3208 = vmatprep.subr.bf16.mxu0 %v2338
        %3209 = vmatpush1.bf16.msra.mxu0 %v2337
        %3210 = vmatprep.subr.bf16.mxu0 %v2352
        %3211 = vmatpush1.bf16.msra.mxu0 %v2351
        %3212 = vmatprep.subr.bf16.mxu0 %v2366
        %3213 = vmatpush1.bf16.msra.mxu0 %v2365
        %3214 = vmatprep.subr.bf16.mxu0 %v2380
        %3215 = vmatpush1.bf16.msra.mxu0 %v2379
        %3216 = vmatprep.subr.bf16.mxu0 %v2394
        %3217 = vmatpush1.bf16.msra.mxu0 %v2393
        %3218 = vmatprep.subr.bf16.mxu0 %v2408
        %3219 = vmatpush1.bf16.msra.mxu0 %v2407
        %3220 = vmatprep.subr.bf16.mxu0 %v2422
        %3221 = vmatpush1.bf16.msra.mxu0 %v2421
        %3222 = vmatprep.subr.bf16.mxu0 %v2436
        %3223 = vmatpush1.bf16.msra.mxu0 %v2435
        %3224 = vmatprep.mubr.bf16.mxu0 %v646
        %3225 = vmatmul.mubr.bf16.gmra.mrb[0].mxu0 %v645
        %v3226 = vpop.f32.mrb[0].mxu0
        %v3227 = vadd.f32 %v3184, %v3226
        %v3228 = vpop.f32.mrb[0].mxu0
        %v3229 = vadd.f32 %v3186, %v3228
        %v3230 = vpop.f32.mrb[0].mxu0
        %v3231 = vadd.f32 %v3188, %v3230
        %v3232 = vpop.f32.mrb[0].mxu0
        %v3233 = vadd.f32 %v3190, %v3232
        %3234 = vdwg.mxu0
        %3235 = vmatprep.subr.bf16.mxu0 %v2004
        %3236 = vmatpush1.bf16.msra.mxu0 %v2003
        %3237 = vmatprep.subr.bf16.mxu0 %v2018
        %3238 = vmatpush1.bf16.msra.mxu0 %v2017
        %3239 = vmatprep.subr.bf16.mxu0 %v2032
        %3240 = vmatpush1.bf16.msra.mxu0 %v2031
        %3241 = vmatprep.subr.bf16.mxu0 %v2046
        %3242 = vmatpush1.bf16.msra.mxu0 %v2045
        %3243 = vmatprep.subr.bf16.mxu0 %v2060
        %3244 = vmatpush1.bf16.msra.mxu0 %v2059
        %3245 = vmatprep.subr.bf16.mxu0 %v2074
        %3246 = vmatpush1.bf16.msra.mxu0 %v2073
        %3247 = vmatprep.subr.bf16.mxu0 %v2088
        %3248 = vmatpush1.bf16.msra.mxu0 %v2087
        %3249 = vmatprep.subr.bf16.mxu0 %v2102
        %3250 = vmatpush1.bf16.msra.mxu0 %v2101
        %3251 = vmatprep.subr.bf16.mxu0 %v2116
        %3252 = vmatpush1.bf16.msra.mxu0 %v2115
        %3253 = vmatprep.subr.bf16.mxu0 %v2130
        %3254 = vmatpush1.bf16.msra.mxu0 %v2129
        %3255 = vmatprep.subr.bf16.mxu0 %v2144
        %3256 = vmatpush1.bf16.msra.mxu0 %v2143
        %3257 = vmatprep.subr.bf16.mxu0 %v2158
        %3258 = vmatpush1.bf16.msra.mxu0 %v2157
        %3259 = vmatprep.subr.bf16.mxu0 %v2172
        %3260 = vmatpush1.bf16.msra.mxu0 %v2171
        %3261 = vmatprep.subr.bf16.mxu0 %v2186
        %3262 = vmatpush1.bf16.msra.mxu0 %v2185
        %3263 = vmatprep.subr.bf16.mxu0 %v2200
        %3264 = vmatpush1.bf16.msra.mxu0 %v2199
        %3265 = vmatprep.subr.bf16.mxu0 %v2214
        %3266 = vmatpush1.bf16.msra.mxu0 %v2213
        %3267 = vmatprep.mubr.bf16.mxu0 %v644
        %3268 = vmatmul.mubr.bf16.gmra.mrb[0].mxu0 %v643
        %v3269 = vpop.f32.mrb[0].mxu0
        %v3270 = vadd.f32 0.0, %v3269
        %v3271 = vpop.f32.mrb[0].mxu0
        %v3272 = vadd.f32 0.0, %v3271
        %v3273 = vpop.f32.mrb[0].mxu0
        %v3274 = vadd.f32 0.0, %v3273
        %v3275 = vpop.f32.mrb[0].mxu0
        %v3276 = vadd.f32 0.0, %v3275
        %3277 = vdwg.mxu0
        %3278 = vmatprep.subr.bf16.mxu0 %v2228
        %3279 = vmatpush1.bf16.msra.mxu0 %v2227
        %3280 = vmatprep.subr.bf16.mxu0 %v2242
        %3281 = vmatpush1.bf16.msra.mxu0 %v2241
        %3282 = vmatprep.subr.bf16.mxu0 %v2256
        %3283 = vmatpush1.bf16.msra.mxu0 %v2255
        %3284 = vmatprep.subr.bf16.mxu0 %v2270
        %3285 = vmatpush1.bf16.msra.mxu0 %v2269
        %3286 = vmatprep.subr.bf16.mxu0 %v2284
        %3287 = vmatpush1.bf16.msra.mxu0 %v2283
        %3288 = vmatprep.subr.bf16.mxu0 %v2298
        %3289 = vmatpush1.bf16.msra.mxu0 %v2297
        %3290 = vmatprep.subr.bf16.mxu0 %v2312
        %3291 = vmatpush1.bf16.msra.mxu0 %v2311
        %3292 = vmatprep.subr.bf16.mxu0 %v2326
        %3293 = vmatpush1.bf16.msra.mxu0 %v2325
        %3294 = vmatprep.subr.bf16.mxu0 %v2340
        %3295 = vmatpush1.bf16.msra.mxu0 %v2339
        %3296 = vmatprep.subr.bf16.mxu0 %v2354
        %3297 = vmatpush1.bf16.msra.mxu0 %v2353
        %3298 = vmatprep.subr.bf16.mxu0 %v2368
        %3299 = vmatpush1.bf16.msra.mxu0 %v2367
        %3300 = vmatprep.subr.bf16.mxu0 %v2382
        %3301 = vmatpush1.bf16.msra.mxu0 %v2381
        %3302 = vmatprep.subr.bf16.mxu0 %v2396
        %3303 = vmatpush1.bf16.msra.mxu0 %v2395
        %3304 = vmatprep.subr.bf16.mxu0 %v2410
        %3305 = vmatpush1.bf16.msra.mxu0 %v2409
        %3306 = vmatprep.subr.bf16.mxu0 %v2424
        %3307 = vmatpush1.bf16.msra.mxu0 %v2423
        %3308 = vmatprep.subr.bf16.mxu0 %v2438
        %3309 = vmatpush1.bf16.msra.mxu0 %v2437
        %3310 = vmatprep.mubr.bf16.mxu0 %v646
        %3311 = vmatmul.mubr.bf16.gmra.mrb[0].mxu0 %v645
        %v3312 = vpop.f32.mrb[0].mxu0
        %v3313 = vadd.f32 %v3270, %v3312
        %v3314 = vpop.f32.mrb[0].mxu0
        %v3315 = vadd.f32 %v3272, %v3314
        %v3316 = vpop.f32.mrb[0].mxu0
        %v3317 = vadd.f32 %v3274, %v3316
        %v3318 = vpop.f32.mrb[0].mxu0
        %v3319 = vadd.f32 %v3276, %v3318
        %3320 = vdwg.mxu0
        %3321 = vmatprep.subr.bf16.mxu0 %v2006
        %3322 = vmatpush1.bf16.msra.mxu0 %v2005
        %3323 = vmatprep.subr.bf16.mxu0 %v2020
        %3324 = vmatpush1.bf16.msra.mxu0 %v2019
        %3325 = vmatprep.subr.bf16.mxu0 %v2034
        %3326 = vmatpush1.bf16.msra.mxu0 %v2033
        %3327 = vmatprep.subr.bf16.mxu0 %v2048
        %3328 = vmatpush1.bf16.msra.mxu0 %v2047
        %3329 = vmatprep.subr.bf16.mxu0 %v2062
        %3330 = vmatpush1.bf16.msra.mxu0 %v2061
        %3331 = vmatprep.subr.bf16.mxu0 %v2076
        %3332 = vmatpush1.bf16.msra.mxu0 %v2075
        %3333 = vmatprep.subr.bf16.mxu0 %v2090
        %3334 = vmatpush1.bf16.msra.mxu0 %v2089
        %3335 = vmatprep.subr.bf16.mxu0 %v2104
        %3336 = vmatpush1.bf16.msra.mxu0 %v2103
        %3337 = vmatprep.subr.bf16.mxu0 %v2118
        %3338 = vmatpush1.bf16.msra.mxu0 %v2117
        %3339 = vmatprep.subr.bf16.mxu0 %v2132
        %3340 = vmatpush1.bf16.msra.mxu0 %v2131
        %3341 = vmatprep.subr.bf16.mxu0 %v2146
        %3342 = vmatpush1.bf16.msra.mxu0 %v2145
        %3343 = vmatprep.subr.bf16.mxu0 %v2160
        %3344 = vmatpush1.bf16.msra.mxu0 %v2159
        %3345 = vmatprep.subr.bf16.mxu0 %v2174
        %3346 = vmatpush1.bf16.msra.mxu0 %v2173
        %3347 = vmatprep.subr.bf16.mxu0 %v2188
        %3348 = vmatpush1.bf16.msra.mxu0 %v2187
        %3349 = vmatprep.subr.bf16.mxu0 %v2202
        %3350 = vmatpush1.bf16.msra.mxu0 %v2201
        %3351 = vmatprep.subr.bf16.mxu0 %v2216
        %3352 = vmatpush1.bf16.msra.mxu0 %v2215
        %3353 = vmatprep.mubr.bf16.mxu0 %v644
        %3354 = vmatmul.mubr.bf16.gmra.mrb[0].mxu0 %v643
        %v3355 = vpop.f32.mrb[0].mxu0
        %v3356 = vadd.f32 0.0, %v3355
        %v3357 = vpop.f32.mrb[0].mxu0
        %v3358 = vadd.f32 0.0, %v3357
        %v3359 = vpop.f32.mrb[0].mxu0
        %v3360 = vadd.f32 0.0, %v3359
        %v3361 = vpop.f32.mrb[0].mxu0
        %v3362 = vadd.f32 0.0, %v3361
        %3363 = vdwg.mxu0
        %3364 = vmatprep.subr.bf16.mxu0 %v2230
        %3365 = vmatpush1.bf16.msra.mxu0 %v2229
        %3366 = vmatprep.subr.bf16.mxu0 %v2244
        %3367 = vmatpush1.bf16.msra.mxu0 %v2243
        %3368 = vmatprep.subr.bf16.mxu0 %v2258
        %3369 = vmatpush1.bf16.msra.mxu0 %v2257
        %3370 = vmatprep.subr.bf16.mxu0 %v2272
        %3371 = vmatpush1.bf16.msra.mxu0 %v2271
        %3372 = vmatprep.subr.bf16.mxu0 %v2286
        %3373 = vmatpush1.bf16.msra.mxu0 %v2285
        %3374 = vmatprep.subr.bf16.mxu0 %v2300
        %3375 = vmatpush1.bf16.msra.mxu0 %v2299
        %3376 = vmatprep.subr.bf16.mxu0 %v2314
        %3377 = vmatpush1.bf16.msra.mxu0 %v2313
        %3378 = vmatprep.subr.bf16.mxu0 %v2328
        %3379 = vmatpush1.bf16.msra.mxu0 %v2327
        %3380 = vmatprep.subr.bf16.mxu0 %v2342
        %3381 = vmatpush1.bf16.msra.mxu0 %v2341
        %3382 = vmatprep.subr.bf16.mxu0 %v2356
        %3383 = vmatpush1.bf16.msra.mxu0 %v2355
        %3384 = vmatprep.subr.bf16.mxu0 %v2370
        %3385 = vmatpush1.bf16.msra.mxu0 %v2369
        %3386 = vmatprep.subr.bf16.mxu0 %v2384
        %3387 = vmatpush1.bf16.msra.mxu0 %v2383
        %3388 = vmatprep.subr.bf16.mxu0 %v2398
        %3389 = vmatpush1.bf16.msra.mxu0 %v2397
        %3390 = vmatprep.subr.bf16.mxu0 %v2412
        %3391 = vmatpush1.bf16.msra.mxu0 %v2411
        %3392 = vmatprep.subr.bf16.mxu0 %v2426
        %3393 = vmatpush1.bf16.msra.mxu0 %v2425
        %3394 = vmatprep.subr.bf16.mxu0 %v2440
        %3395 = vmatpush1.bf16.msra.mxu0 %v2439
        %3396 = vmatprep.mubr.bf16.mxu0 %v646
        %3397 = vmatmul.mubr.bf16.gmra.mrb[0].mxu0 %v645
        %v3398 = vpop.f32.mrb[0].mxu0
        %v3399 = vadd.f32 %v3356, %v3398
        %v3400 = vpop.f32.mrb[0].mxu0
        %v3401 = vadd.f32 %v3358, %v3400
        %v3402 = vpop.f32.mrb[0].mxu0
        %v3403 = vadd.f32 %v3360, %v3402
        %v3404 = vpop.f32.mrb[0].mxu0
        %v3405 = vadd.f32 %v3362, %v3404
        %3406 = vdwg.mxu0
        %3407 = vmatprep.subr.bf16.mxu0 %v2008
        %3408 = vmatpush1.bf16.msra.mxu0 %v2007
        %3409 = vmatprep.subr.bf16.mxu0 %v2022
        %3410 = vmatpush1.bf16.msra.mxu0 %v2021
        %3411 = vmatprep.subr.bf16.mxu0 %v2036
        %3412 = vmatpush1.bf16.msra.mxu0 %v2035
        %3413 = vmatprep.subr.bf16.mxu0 %v2050
        %3414 = vmatpush1.bf16.msra.mxu0 %v2049
        %3415 = vmatprep.subr.bf16.mxu0 %v2064
        %3416 = vmatpush1.bf16.msra.mxu0 %v2063
        %3417 = vmatprep.subr.bf16.mxu0 %v2078
        %3418 = vmatpush1.bf16.msra.mxu0 %v2077
        %3419 = vmatprep.subr.bf16.mxu0 %v2092
        %3420 = vmatpush1.bf16.msra.mxu0 %v2091
        %3421 = vmatprep.subr.bf16.mxu0 %v2106
        %3422 = vmatpush1.bf16.msra.mxu0 %v2105
        %3423 = vmatprep.subr.bf16.mxu0 %v2120
        %3424 = vmatpush1.bf16.msra.mxu0 %v2119
        %3425 = vmatprep.subr.bf16.mxu0 %v2134
        %3426 = vmatpush1.bf16.msra.mxu0 %v2133
        %3427 = vmatprep.subr.bf16.mxu0 %v2148
        %3428 = vmatpush1.bf16.msra.mxu0 %v2147
        %3429 = vmatprep.subr.bf16.mxu0 %v2162
        %3430 = vmatpush1.bf16.msra.mxu0 %v2161
        %3431 = vmatprep.subr.bf16.mxu0 %v2176
        %3432 = vmatpush1.bf16.msra.mxu0 %v2175
        %3433 = vmatprep.subr.bf16.mxu0 %v2190
        %3434 = vmatpush1.bf16.msra.mxu0 %v2189
        %3435 = vmatprep.subr.bf16.mxu0 %v2204
        %3436 = vmatpush1.bf16.msra.mxu0 %v2203
        %3437 = vmatprep.subr.bf16.mxu0 %v2218
        %3438 = vmatpush1.bf16.msra.mxu0 %v2217
        %3439 = vmatprep.mubr.bf16.mxu0 %v644
        %3440 = vmatmul.mubr.bf16.gmra.mrb[0].mxu0 %v643
        %v3441 = vpop.f32.mrb[0].mxu0
        %v3442 = vadd.f32 0.0, %v3441
        %v3443 = vpop.f32.mrb[0].mxu0
        %v3444 = vadd.f32 0.0, %v3443
        %v3445 = vpop.f32.mrb[0].mxu0
        %v3446 = vadd.f32 0.0, %v3445
        %v3447 = vpop.f32.mrb[0].mxu0
        %v3448 = vadd.f32 0.0, %v3447
        %3449 = vdwg.mxu0
        %3450 = vmatprep.subr.bf16.mxu0 %v2232
        %3451 = vmatpush1.bf16.msra.mxu0 %v2231
        %3452 = vmatprep.subr.bf16.mxu0 %v2246
        %3453 = vmatpush1.bf16.msra.mxu0 %v2245
        %3454 = vmatprep.subr.bf16.mxu0 %v2260
        %3455 = vmatpush1.bf16.msra.mxu0 %v2259
        %3456 = vmatprep.subr.bf16.mxu0 %v2274
        %3457 = vmatpush1.bf16.msra.mxu0 %v2273
        %3458 = vmatprep.subr.bf16.mxu0 %v2288
        %3459 = vmatpush1.bf16.msra.mxu0 %v2287
        %3460 = vmatprep.subr.bf16.mxu0 %v2302
        %3461 = vmatpush1.bf16.msra.mxu0 %v2301
        %3462 = vmatprep.subr.bf16.mxu0 %v2316
        %3463 = vmatpush1.bf16.msra.mxu0 %v2315
        %3464 = vmatprep.subr.bf16.mxu0 %v2330
        %3465 = vmatpush1.bf16.msra.mxu0 %v2329
        %3466 = vmatprep.subr.bf16.mxu0 %v2344
        %3467 = vmatpush1.bf16.msra.mxu0 %v2343
        %3468 = vmatprep.subr.bf16.mxu0 %v2358
        %3469 = vmatpush1.bf16.msra.mxu0 %v2357
        %3470 = vmatprep.subr.bf16.mxu0 %v2372
        %3471 = vmatpush1.bf16.msra.mxu0 %v2371
        %3472 = vmatprep.subr.bf16.mxu0 %v2386
        %3473 = vmatpush1.bf16.msra.mxu0 %v2385
        %3474 = vmatprep.subr.bf16.mxu0 %v2400
        %3475 = vmatpush1.bf16.msra.mxu0 %v2399
        %3476 = vmatprep.subr.bf16.mxu0 %v2414
        %3477 = vmatpush1.bf16.msra.mxu0 %v2413
        %3478 = vmatprep.subr.bf16.mxu0 %v2428
        %3479 = vmatpush1.bf16.msra.mxu0 %v2427
        %3480 = vmatprep.subr.bf16.mxu0 %v2442
        %3481 = vmatpush1.bf16.msra.mxu0 %v2441
        %3482 = vmatprep.mubr.bf16.mxu0 %v646
        %3483 = vmatmul.mubr.bf16.gmra.mrb[0].mxu0 %v645
        %v3484 = vpop.f32.mrb[0].mxu0
        %v3485 = vadd.f32 %v3442, %v3484
        %v3486 = vpop.f32.mrb[0].mxu0
        %v3487 = vadd.f32 %v3444, %v3486
        %v3488 = vpop.f32.mrb[0].mxu0
        %v3489 = vadd.f32 %v3446, %v3488
        %v3490 = vpop.f32.mrb[0].mxu0
        %v3491 = vadd.f32 %v3448, %v3490
        %3492 = vdwg.mxu0
        %v3493 = vpack.c.bf16 %v2973, %v2969
        %v3494 = vpack.c.bf16 %v2975, %v2971
        %v3495 = vpack.c.bf16 %v3059, %v3055
        %v3496 = vpack.c.bf16 %v3061, %v3057
        %v3497 = vpack.c.bf16 %v3145, %v3141
        %v3498 = vpack.c.bf16 %v3147, %v3143
        %v3499 = vpack.c.bf16 %v3231, %v3227
        %v3500 = vpack.c.bf16 %v3233, %v3229
        %v3501 = vpack.c.bf16 %v3317, %v3313
        %v3502 = vpack.c.bf16 %v3319, %v3315
        %v3503 = vpack.c.bf16 %v3403, %v3399
        %v3504 = vpack.c.bf16 %v3405, %v3401
        %v3505 = vpack.c.bf16 %v3489, %v3485
        %v3506 = vpack.c.bf16 %v3491, %v3487
        %v3521 = vunpack.c.l.b16 %v3493
        %v3522 = vunpack.c.l.b16 %v3494
        %v3523 = vunpack.c.l.b16 %v3495
        %v3524 = vunpack.c.l.b16 %v3496
        %v3525 = vunpack.c.l.b16 %v3497
        %v3526 = vunpack.c.l.b16 %v3498
        %v3527 = vunpack.c.l.b16 %v3499
        %v3528 = vunpack.c.l.b16 %v3500
        %v3529 = vunpack.c.l.b16 %v3501
        %v3530 = vunpack.c.l.b16 %v3502
        %v3531 = vunpack.c.l.b16 %v3503
        %v3532 = vunpack.c.l.b16 %v3504
        %v3533 = vunpack.c.l.b16 %v3505
        %v3534 = vunpack.c.l.b16 %v3506
        %v3535 = vunpack.c.h.b16 %v3493
        %v3536 = vunpack.c.h.b16 %v3494
        %v3537 = vunpack.c.h.b16 %v3495
        %v3538 = vunpack.c.h.b16 %v3496
        %v3539 = vunpack.c.h.b16 %v3497
        %v3540 = vunpack.c.h.b16 %v3498
        %v3541 = vunpack.c.h.b16 %v3499
        %v3542 = vunpack.c.h.b16 %v3500
        %v3543 = vunpack.c.h.b16 %v3501
        %v3544 = vunpack.c.h.b16 %v3502
        %v3545 = vunpack.c.h.b16 %v3503
        %v3546 = vunpack.c.h.b16 %v3504
        %v3547 = vunpack.c.h.b16 %v3505
        %v3548 = vunpack.c.h.b16 %v3506
        %v3549 = vpack.c.b16 %v3522, %v3521
        %v3550 = vpack.c.b16 %v3524, %v3523
        %v3551 = vpack.c.b16 %v3526, %v3525
        %v3552 = vpack.c.b16 %v3528, %v3527
        %v3553 = vpack.c.b16 %v3530, %v3529
        %v3554 = vpack.c.b16 %v3532, %v3531
        %v3555 = vpack.c.b16 %v3534, %v3533
        %v3556 = vpack.c.b16 %v3536, %v3535
        %v3557 = vpack.c.b16 %v3538, %v3537
        %v3558 = vpack.c.b16 %v3540, %v3539
        %v3559 = vpack.c.b16 %v3542, %v3541
        %v3560 = vpack.c.b16 %v3544, %v3543
        %v3561 = vpack.c.b16 %v3546, %v3545
        %v3562 = vpack.c.b16 %v3548, %v3547
        %3577 = vst [vmem:[%s176] sm:$0xff] %v3549
        %3578 = vst [vmem:[%s176 + $0x8] sm:$0xff] %v3550
        %3579 = vst [vmem:[%s176 + $0x10] sm:$0xff] %v3551
        %3580 = vst [vmem:[%s176 + $0x18] sm:$0xff] %v3552
        %3581 = vst [vmem:[%s176 + $0x20] sm:$0xff] %v3553
        %3582 = vst [vmem:[%s176 + $0x28] sm:$0xff] %v3554
        %3583 = vst [vmem:[%s176 + $0x30] sm:$0xff] %v3555
        %3584 = vst [vmem:[%s176 + $0x38] sm:$0xff] %v3556
        %3585 = vst [vmem:[%s176 + $0x40] sm:$0xff] %v3557
        %3586 = vst [vmem:[%s176 + $0x48] sm:$0xff] %v3558
        %3587 = vst [vmem:[%s176 + $0x50] sm:$0xff] %v3559
        %3588 = vst [vmem:[%s176 + $0x58] sm:$0xff] %v3560
        %3589 = vst [vmem:[%s176 + $0x60] sm:$0xff] %v3561
        %3590 = vst [vmem:[%s176 + $0x68] sm:$0xff] %v3562
        %s3591 = sand.u32 %s75, 1
        %s3592 = scalar_lea.sflag [#allocation4], %s3591
        %s3593 = sand.u32 %s75, 1
        %s3594 = smul.addr %s3593, 112
        %s3595 = scalar_lea.vmem [#allocation7], %s3594
        // Predicated region
        $region37: #{tpu_custom_call.1} parent=27 // pred_check
          %p3596 = pneg %p85
        $region38: #{tpu_custom_call.1} parent=27 // pred_check_branch
          %3598 = sbr.rel (%p3596) target = $region40
        $region39: #{tpu_custom_call.1} parent=27 // pred_region
          %s3599 = smul.u32 14, %s20
          %s3601 = ssub.s32 1792, 1792
          %3602 = vsyncadd %s3592, %s3601
          %s3603 = smul.addr %s3599, 64
          %s3604 = scalar_lea.hbm %s2, %s3603
          %s3605 = sshll.u32 %s3595, 4
          %s3606 = int_to_ptr.vmem [resolvable:$true] %s3605
          %3611 = dma.vmem_to_hbm [thread:$0]  %s3606, 1792, %s3604, %s3592, 896, 6272, 56
        $region40: #{tpu_custom_call.1} parent=27 // pred_fallthru
          _
      $region28: #{tpu_custom_call.1} parent=5 // pred_fallthru
        _
      %p3612 = scmp.le.s32.totalorder 2, %s15
      // Predicated region
      $region41: #{tpu_custom_call.1} parent=5 // pred_check
        %p3613 = pneg %p3612
      $region42: #{tpu_custom_call.1} parent=5 // pred_check_branch
        %3615 = sbr.rel (%p3613) target = $region44
      $region43: #{tpu_custom_call.1} parent=5 // pred_region
        %s3616 = ssub.s32 %s15, 2
        // Predicated region
        $region45: #{tpu_custom_call.1} parent=43 // pred_check
          %p3617 = pneg %p91
        $region46: #{tpu_custom_call.1} parent=43 // pred_check_branch
          %3619 = sbr.rel (%p3617) target = $region48
        $region47: #{tpu_custom_call.1} parent=43 // pred_region
          %s3620 = sand.u32 %s76, 1
          %s3621 = scalar_lea.sflag [#allocation4], %s3620
          %s3622 = sand.u32 %s76, 1
          %s3623 = smul.addr %s3622, 112
          %s3624 = scalar_lea.vmem [#allocation7], %s3623
          %3625 = dma.done %s3621, 1792
        $region48: #{tpu_custom_call.1} parent=43 // pred_fallthru
          _
      $region44: #{tpu_custom_call.1} parent=5 // pred_fallthru
        _
    $region6: #{tpu_custom_call.1} parent=1 // loop_footer
      %s19 = sadd.s32 1, %s15
    $region7: #{tpu_custom_call.1} parent=1 // loop_footer_branch
      %14 = sbr.rel target = $region3
    $region8: #{tpu_custom_call.1} parent=1 // loop_exit
      _
    %3626 = vsyncpa [#allocation3], 1
    %s3627 = scalar_lea.sflag [#allocation3], 1
    %3628 = vsyncpa %s3627, 1
    %3629 = vsyncpa [#allocation6], 1
    %s3630 = scalar_lea.sflag [#allocation6], 1
    %3631 = vsyncpa %s3630, 1
    %3632 = vsyncpa [#allocation4], 1
    %s3633 = scalar_lea.sflag [#allocation4], 1
    %3634 = vsyncpa %s3633, 1

</llo_original>
